<compile_context>
chip_gen: v7x
topology: tpu7x:2x2x1
jax: 0.10.0
libtpu: 0.0.40
codegen_flags: <defaults>
</compile_context>

<pallas_src>
import jax
import jax.numpy as jnp
from jax import lax
from jax.experimental import pallas as pl
from jax.experimental.pallas import tpu as pltpu

N_ITERS = 40   # fixed number of forward fixed-point iterations (the "solver")
LANE = 128     # vreg lane width
SUBLANE = 8    # vreg sublane count


def _round_up(x, m):
    return (x + m - 1) // m * m


def deq_forward(x, W, U, b, *, batch_tile=None):
    """Returns (z_star, forward_res) like DEQModel.forward in eval mode."""
    B, d_in = x.shape
    n_states = W.shape[0]

    # ---- one-time wrapper-side layout prep (nothing on the serial chain) ----
    d_in_p = _round_up(d_in, LANE)
    n_states_p = _round_up(n_states, LANE)
    B_p = _round_up(B, SUBLANE)

    # bf16 MXU inputs; pre-transposed and zero-padded to lane-dense shapes.
    x_p = jnp.zeros((B_p, d_in_p), jnp.bfloat16).at[:B, :d_in].set(
        x.astype(jnp.bfloat16))
    Wt_p = jnp.zeros((n_states_p, n_states_p), jnp.bfloat16).at[
        :n_states, :n_states].set(W.T.astype(jnp.bfloat16))
    Ut_p = jnp.zeros((d_in_p, n_states_p), jnp.bfloat16).at[
        :d_in, :n_states].set(U.T.astype(jnp.bfloat16))
    b_p = jnp.zeros((1, n_states_p), jnp.float32).at[0, :n_states].set(
        b.astype(jnp.float32))

    if batch_tile is None:
        # Keep the whole batch in one tile: the grid is a sequential loop on
        # one TensorCore, and each tile replays the full 40-step latency chain.
        batch_tile = B_p
    batch_tile = _round_up(batch_tile, SUBLANE)
    assert B_p % batch_tile == 0
    n_tiles = B_p // batch_tile
    needs_row_mask = (B_p != B)

    def deq_kernel(x_ref, wt_ref, ut_ref, b_ref, z_ref, res_ref):
        Wt = wt_ref[...]                               # (n_states_p, n_states_p) bf16
        # Loop-invariant input injection, computed once (f32 accumulation).
        ux = jnp.dot(x_ref[...], ut_ref[...],
                     preferred_element_type=jnp.float32) + b_ref[...]
        z0 = jnp.zeros_like(ux)                        # f32

        def f(z):
            # bf16 MXU inputs (single-pass), f32 accumulate; add + tanh in f32.
            return jnp.tanh(
                jnp.dot(z.astype(jnp.bfloat16), Wt,
                        preferred_element_type=jnp.float32) + ux)

        # Fixed-point (forward) iteration solver.  Static trip count, tiny
        # body -> full unroll removes loop overhead, full LLO visibility.
        z_star = lax.fori_loop(0, N_ITERS, lambda _, z: f(z), z0, unroll=True)

        # This tile's contribution to ||f(z*) - z*||_2^2 (sqrt in wrapper).
        diff = f(z_star) - z_star
        if needs_row_mask:
            row = (lax.broadcasted_iota(jnp.int32, diff.shape, 0)
                   + pl.program_id(0) * batch_tile)
            diff = jnp.where(row < B, diff, 0.0)       # drop padded batch rows
        res_ref[pl.program_id(0), 0] = jnp.sum(diff * diff)

        z_ref[...] = z_star

    # Advisory cost hint: this call is latency/overhead dominated at toy sizes.
    flops = (2 * B_p * d_in_p * n_states_p
             + 2 * (N_ITERS + 1) * B_p * n_states_p * n_states_p)
    transcendentals = (N_ITERS + 1) * B_p * n_states_p
    bytes_accessed = (x_p.size * 2 + Wt_p.size * 2 + Ut_p.size * 2
                      + b_p.size * 4 + B_p * n_states_p * 4 + n_tiles * 4)

    z_pad, res_sq = pl.pallas_call(
        deq_kernel,
        out_shape=(
            jax.ShapeDtypeStruct((B_p, n_states_p), jnp.float32),
            jax.ShapeDtypeStruct((n_tiles, 1), jnp.float32),
        ),
        grid=(n_tiles,),
        in_specs=[
            pl.BlockSpec((batch_tile, d_in_p), lambda i: (i, 0)),      # x tile
            pl.BlockSpec((n_states_p, n_states_p), lambda i: (0, 0)),  # Wt (resident)
            pl.BlockSpec((d_in_p, n_states_p), lambda i: (0, 0)),      # Ut (resident)
            pl.BlockSpec((1, n_states_p), lambda i: (0, 0)),           # b  (resident)
        ],
        out_specs=(
            pl.BlockSpec((batch_tile, n_states_p), lambda i: (i, 0)),  # z* tile
            # Scalar residual lives in SMEM (no masked vst.msk into a padded
            # VMEM tile); each grid step writes its own element.
            pl.BlockSpec(memory_space=pltpu.MemorySpace.SMEM),
        ),
        # n_tiles == 1 here, so megacore sharding cannot help; with exactly 2
        # tiles on v7x, use ("parallel",) and switch the residual to a
        # per-tile blocked out_spec (one element per core) first.
        compiler_params=pltpu.CompilerParams(
            dimension_semantics=("arbitrary",)),
        cost_estimate=pl.CostEstimate(
            flops=flops, transcendentals=transcendentals,
            bytes_accessed=bytes_accessed),
    )(x_p, Wt_p, Ut_p, b_p)

    z_star = z_pad[:B, :n_states]
    forward_res = jnp.sqrt(jnp.sum(res_sq))
    return z_star, forward_res


def reference_forward(x, W, U, b):
    """Pure-JAX reference with the same bf16-input / f32-accumulate arithmetic."""
    Wt = W.T.astype(jnp.bfloat16)
    Ut = U.T.astype(jnp.bfloat16)
    ux = jnp.dot(x.astype(jnp.bfloat16), Ut,
                 preferred_element_type=jnp.float32) + b[None, :]

    def f(z):
        return jnp.tanh(jnp.dot(z.astype(jnp.bfloat16), Wt,
                                preferred_element_type=jnp.float32) + ux)

    z = jnp.zeros((x.shape[0], W.shape[0]), jnp.float32)
    for _ in range(N_ITERS):
        z = f(z)
    res = jnp.sqrt(jnp.sum((f(z) - z) ** 2))
    return z, res


if __name__ == "__main__":
    key = jax.random.PRNGKey(0)
    kx, kw, ku, kb = jax.random.split(key, 4)

    B = 8          # batch
    d_in = 32      # input feature dim
    n_states = 32  # f.n_states (hidden / equilibrium state dim)

    x = jax.random.normal(kx, (B, d_in), dtype=jnp.float32)
    # Scale W so the map is a solid contraction (spectral norm ~0.9): the
    # fixed-point iteration converges and bf16 rounding does not amplify.
    W = 0.45 / jnp.sqrt(n_states) * jax.random.normal(
        kw, (n_states, n_states), jnp.float32)
    U = jax.random.normal(ku, (n_states, d_in), jnp.float32) / jnp.sqrt(d_in)
    b = 0.1 * jax.random.normal(kb, (n_states,), jnp.float32)

    z_star, forward_res = deq_forward(x, W, U, b)
    jax.block_until_ready(z_star)
    jax.block_until_ready(forward_res)

    z_ref, res_ref = reference_forward(x, W, U, b)
    assert jnp.allclose(z_star, z_ref, atol=2e-3, rtol=2e-3), "z* mismatch vs reference"
    assert jnp.allclose(forward_res, res_ref, atol=2e-3), "residual mismatch"

    print("KERNEL_OK")
</pallas_src>

<mosaic_0001>
module attributes {stable_mosaic.version = 11 : i64} {
  func.func @deq_kernel(%arg0: i32, %arg1: memref<8x128xbf16, #tpu.memory_space<vmem>>, %arg2: memref<128x128xbf16, #tpu.memory_space<vmem>>, %arg3: memref<128x128xbf16, #tpu.memory_space<vmem>>, %arg4: memref<1x128xf32, #tpu.memory_space<vmem>>, %arg5: memref<8x128xf32, #tpu.memory_space<vmem>>, %arg6: memref<1x1xf32, #tpu.memory_space<smem>>) attributes {dimension_semantics = [#tpu.dimension_semantics<arbitrary>], iteration_bounds = array<i64: 1>, scalar_prefetch = 0 : i64, scratch_operands = 0 : i64, tpu.core_type = #tpu.core_type<tc>, window_params = [{transform_indices = @transform_0, window_bounds = array<i64: 8, 128>}, {pipeline_mode = #tpu.pipeline_mode<synchronous>, transform_indices = @transform_1, window_bounds = array<i64: 128, 128>}, {pipeline_mode = #tpu.pipeline_mode<synchronous>, transform_indices = @transform_2, window_bounds = array<i64: 128, 128>}, {pipeline_mode = #tpu.pipeline_mode<synchronous>, transform_indices = @transform_3, window_bounds = array<i64: 1, 128>}, {transform_indices = @transform_4, window_bounds = array<i64: 8, 128>}, {transform_indices = @transform_5, window_bounds = array<i64: 1, 1>}]} {
    %c0 = arith.constant 0 : index
    %c0_0 = arith.constant 0 : index
    %0 = vector.load %arg2[%c0, %c0_0] : memref<128x128xbf16, #tpu.memory_space<vmem>>, vector<128x128xbf16>
    %c0_1 = arith.constant 0 : index
    %c0_2 = arith.constant 0 : index
    %1 = vector.load %arg1[%c0_1, %c0_2] : memref<8x128xbf16, #tpu.memory_space<vmem>>, vector<8x128xbf16>
    %c0_3 = arith.constant 0 : index
    %c0_4 = arith.constant 0 : index
    %2 = vector.load %arg3[%c0_3, %c0_4] : memref<128x128xbf16, #tpu.memory_space<vmem>>, vector<128x128xbf16>
    %cst = arith.constant dense<0.000000e+00> : vector<8x128xf32>
    %3 = tpu.matmul %1, %2, %cst {dimension_numbers = #tpu.dot_dimension_numbers<[1], [0], [0], [1], [0, 0, 1, 1], [], []>} : vector<8x128xbf16>, vector<128x128xbf16>, vector<8x128xf32> -> vector<8x128xf32>
    %c0_5 = arith.constant 0 : index
    %c0_6 = arith.constant 0 : index
    %4 = vector.load %arg4[%c0_5, %c0_6] : memref<1x128xf32, #tpu.memory_space<vmem>>, vector<1x128xf32>
    %5 = vector.broadcast %4 : vector<1x128xf32> to vector<8x128xf32>
    %6 = arith.addf %3, %5 : vector<8x128xf32>
    %cst_7 = arith.constant 0.000000e+00 : f32
    %7 = vector.broadcast %cst_7 : f32 to vector<8x128xf32>
    %c0_i32 = arith.constant 0 : i32
    %8 = arith.truncf %7 : vector<8x128xf32> to vector<8x128xbf16>
    %cst_8 = arith.constant dense<0.000000e+00> : vector<8x128xf32>
    %9 = tpu.matmul %8, %0, %cst_8 {dimension_numbers = #tpu.dot_dimension_numbers<[1], [0], [0], [1], [0, 0, 1, 1], [], []>} : vector<8x128xbf16>, vector<128x128xbf16>, vector<8x128xf32> -> vector<8x128xf32>
    %10 = arith.addf %9, %6 : vector<8x128xf32>
    %11 = math.tanh %10 : vector<8x128xf32>
    %c1_i32 = arith.constant 1 : i32
    %12 = arith.truncf %11 : vector<8x128xf32> to vector<8x128xbf16>
    %cst_9 = arith.constant dense<0.000000e+00> : vector<8x128xf32>
    %13 = tpu.matmul %12, %0, %cst_9 {dimension_numbers = #tpu.dot_dimension_numbers<[1], [0], [0], [1], [0, 0, 1, 1], [], []>} : vector<8x128xbf16>, vector<128x128xbf16>, vector<8x128xf32> -> vector<8x128xf32>
    %14 = arith.addf %13, %6 : vector<8x128xf32>
    %15 = math.tanh %14 : vector<8x128xf32>
    %c2_i32 = arith.constant 2 : i32
    %16 = arith.truncf %15 : vector<8x128xf32> to vector<8x128xbf16>
    %cst_10 = arith.constant dense<0.000000e+00> : vector<8x128xf32>
    %17 = tpu.matmul %16, %0, %cst_10 {dimension_numbers = #tpu.dot_dimension_numbers<[1], [0], [0], [1], [0, 0, 1, 1], [], []>} : vector<8x128xbf16>, vector<128x128xbf16>, vector<8x128xf32> -> vector<8x128xf32>
    %18 = arith.addf %17, %6 : vector<8x128xf32>
    %19 = math.tanh %18 : vector<8x128xf32>
    %c3_i32 = arith.constant 3 : i32
    %20 = arith.truncf %19 : vector<8x128xf32> to vector<8x128xbf16>
    %cst_11 = arith.constant dense<0.000000e+00> : vector<8x128xf32>
    %21 = tpu.matmul %20, %0, %cst_11 {dimension_numbers = #tpu.dot_dimension_numbers<[1], [0], [0], [1], [0, 0, 1, 1], [], []>} : vector<8x128xbf16>, vector<128x128xbf16>, vector<8x128xf32> -> vector<8x128xf32>
    %22 = arith.addf %21, %6 : vector<8x128xf32>
    %23 = math.tanh %22 : vector<8x128xf32>
    %c4_i32 = arith.constant 4 : i32
    %24 = arith.truncf %23 : vector<8x128xf32> to vector<8x128xbf16>
    %cst_12 = arith.constant dense<0.000000e+00> : vector<8x128xf32>
    %25 = tpu.matmul %24, %0, %cst_12 {dimension_numbers = #tpu.dot_dimension_numbers<[1], [0], [0], [1], [0, 0, 1, 1], [], []>} : vector<8x128xbf16>, vector<128x128xbf16>, vector<8x128xf32> -> vector<8x128xf32>
    %26 = arith.addf %25, %6 : vector<8x128xf32>
    %27 = math.tanh %26 : vector<8x128xf32>
    %c5_i32 = arith.constant 5 : i32
    %28 = arith.truncf %27 : vector<8x128xf32> to vector<8x128xbf16>
    %cst_13 = arith.constant dense<0.000000e+00> : vector<8x128xf32>
    %29 = tpu.matmul %28, %0, %cst_13 {dimension_numbers = #tpu.dot_dimension_numbers<[1], [0], [0], [1], [0, 0, 1, 1], [], []>} : vector<8x128xbf16>, vector<128x128xbf16>, vector<8x128xf32> -> vector<8x128xf32>
    %30 = arith.addf %29, %6 : vector<8x128xf32>
    %31 = math.tanh %30 : vector<8x128xf32>
    %c6_i32 = arith.constant 6 : i32
    %32 = arith.truncf %31 : vector<8x128xf32> to vector<8x128xbf16>
    %cst_14 = arith.constant dense<0.000000e+00> : vector<8x128xf32>
    %33 = tpu.matmul %32, %0, %cst_14 {dimension_numbers = #tpu.dot_dimension_numbers<[1], [0], [0], [1], [0, 0, 1, 1], [], []>} : vector<8x128xbf16>, vector<128x128xbf16>, vector<8x128xf32> -> vector<8x128xf32>
    %34 = arith.addf %33, %6 : vector<8x128xf32>
    %35 = math.tanh %34 : vector<8x128xf32>
    %c7_i32 = arith.constant 7 : i32
    %36 = arith.truncf %35 : vector<8x128xf32> to vector<8x128xbf16>
    %cst_15 = arith.constant dense<0.000000e+00> : vector<8x128xf32>
    %37 = tpu.matmul %36, %0, %cst_15 {dimension_numbers = #tpu.dot_dimension_numbers<[1], [0], [0], [1], [0, 0, 1, 1], [], []>} : vector<8x128xbf16>, vector<128x128xbf16>, vector<8x128xf32> -> vector<8x128xf32>
    %38 = arith.addf %37, %6 : vector<8x128xf32>
    %39 = math.tanh %38 : vector<8x128xf32>
    %c8_i32 = arith.constant 8 : i32
    %40 = arith.truncf %39 : vector<8x128xf32> to vector<8x128xbf16>
    %cst_16 = arith.constant dense<0.000000e+00> : vector<8x128xf32>
    %41 = tpu.matmul %40, %0, %cst_16 {dimension_numbers = #tpu.dot_dimension_numbers<[1], [0], [0], [1], [0, 0, 1, 1], [], []>} : vector<8x128xbf16>, vector<128x128xbf16>, vector<8x128xf32> -> vector<8x128xf32>
    %42 = arith.addf %41, %6 : vector<8x128xf32>
    %43 = math.tanh %42 : vector<8x128xf32>
    %c9_i32 = arith.constant 9 : i32
    %44 = arith.truncf %43 : vector<8x128xf32> to vector<8x128xbf16>
    %cst_17 = arith.constant dense<0.000000e+00> : vector<8x128xf32>
    %45 = tpu.matmul %44, %0, %cst_17 {dimension_numbers = #tpu.dot_dimension_numbers<[1], [0], [0], [1], [0, 0, 1, 1], [], []>} : vector<8x128xbf16>, vector<128x128xbf16>, vector<8x128xf32> -> vector<8x128xf32>
    %46 = arith.addf %45, %6 : vector<8x128xf32>
    %47 = math.tanh %46 : vector<8x128xf32>
    %c10_i32 = arith.constant 10 : i32
    %48 = arith.truncf %47 : vector<8x128xf32> to vector<8x128xbf16>
    %cst_18 = arith.constant dense<0.000000e+00> : vector<8x128xf32>
    %49 = tpu.matmul %48, %0, %cst_18 {dimension_numbers = #tpu.dot_dimension_numbers<[1], [0], [0], [1], [0, 0, 1, 1], [], []>} : vector<8x128xbf16>, vector<128x128xbf16>, vector<8x128xf32> -> vector<8x128xf32>
    %50 = arith.addf %49, %6 : vector<8x128xf32>
    %51 = math.tanh %50 : vector<8x128xf32>
    %c11_i32 = arith.constant 11 : i32
    %52 = arith.truncf %51 : vector<8x128xf32> to vector<8x128xbf16>
    %cst_19 = arith.constant dense<0.000000e+00> : vector<8x128xf32>
    %53 = tpu.matmul %52, %0, %cst_19 {dimension_numbers = #tpu.dot_dimension_numbers<[1], [0], [0], [1], [0, 0, 1, 1], [], []>} : vector<8x128xbf16>, vector<128x128xbf16>, vector<8x128xf32> -> vector<8x128xf32>
    %54 = arith.addf %53, %6 : vector<8x128xf32>
    %55 = math.tanh %54 : vector<8x128xf32>
    %c12_i32 = arith.constant 12 : i32
    %56 = arith.truncf %55 : vector<8x128xf32> to vector<8x128xbf16>
    %cst_20 = arith.constant dense<0.000000e+00> : vector<8x128xf32>
    %57 = tpu.matmul %56, %0, %cst_20 {dimension_numbers = #tpu.dot_dimension_numbers<[1], [0], [0], [1], [0, 0, 1, 1], [], []>} : vector<8x128xbf16>, vector<128x128xbf16>, vector<8x128xf32> -> vector<8x128xf32>
    %58 = arith.addf %57, %6 : vector<8x128xf32>
    %59 = math.tanh %58 : vector<8x128xf32>
    %c13_i32 = arith.constant 13 : i32
    %60 = arith.truncf %59 : vector<8x128xf32> to vector<8x128xbf16>
    %cst_21 = arith.constant dense<0.000000e+00> : vector<8x128xf32>
    %61 = tpu.matmul %60, %0, %cst_21 {dimension_numbers = #tpu.dot_dimension_numbers<[1], [0], [0], [1], [0, 0, 1, 1], [], []>} : vector<8x128xbf16>, vector<128x128xbf16>, vector<8x128xf32> -> vector<8x128xf32>
    %62 = arith.addf %61, %6 : vector<8x128xf32>
    %63 = math.tanh %62 : vector<8x128xf32>
    %c14_i32 = arith.constant 14 : i32
    %64 = arith.truncf %63 : vector<8x128xf32> to vector<8x128xbf16>
    %cst_22 = arith.constant dense<0.000000e+00> : vector<8x128xf32>
    %65 = tpu.matmul %64, %0, %cst_22 {dimension_numbers = #tpu.dot_dimension_numbers<[1], [0], [0], [1], [0, 0, 1, 1], [], []>} : vector<8x128xbf16>, vector<128x128xbf16>, vector<8x128xf32> -> vector<8x128xf32>
    %66 = arith.addf %65, %6 : vector<8x128xf32>
    %67 = math.tanh %66 : vector<8x128xf32>
    %c15_i32 = arith.constant 15 : i32
    %68 = arith.truncf %67 : vector<8x128xf32> to vector<8x128xbf16>
    %cst_23 = arith.constant dense<0.000000e+00> : vector<8x128xf32>
    %69 = tpu.matmul %68, %0, %cst_23 {dimension_numbers = #tpu.dot_dimension_numbers<[1], [0], [0], [1], [0, 0, 1, 1], [], []>} : vector<8x128xbf16>, vector<128x128xbf16>, vector<8x128xf32> -> vector<8x128xf32>
    %70 = arith.addf %69, %6 : vector<8x128xf32>
    %71 = math.tanh %70 : vector<8x128xf32>
    %c16_i32 = arith.constant 16 : i32
    %72 = arith.truncf %71 : vector<8x128xf32> to vector<8x128xbf16>
    %cst_24 = arith.constant dense<0.000000e+00> : vector<8x128xf32>
    %73 = tpu.matmul %72, %0, %cst_24 {dimension_numbers = #tpu.dot_dimension_numbers<[1], [0], [0], [1], [0, 0, 1, 1], [], []>} : vector<8x128xbf16>, vector<128x128xbf16>, vector<8x128xf32> -> vector<8x128xf32>
    %74 = arith.addf %73, %6 : vector<8x128xf32>
    %75 = math.tanh %74 : vector<8x128xf32>
    %c17_i32 = arith.constant 17 : i32
    %76 = arith.truncf %75 : vector<8x128xf32> to vector<8x128xbf16>
    %cst_25 = arith.constant dense<0.000000e+00> : vector<8x128xf32>
    %77 = tpu.matmul %76, %0, %cst_25 {dimension_numbers = #tpu.dot_dimension_numbers<[1], [0], [0], [1], [0, 0, 1, 1], [], []>} : vector<8x128xbf16>, vector<128x128xbf16>, vector<8x128xf32> -> vector<8x128xf32>
    %78 = arith.addf %77, %6 : vector<8x128xf32>
    %79 = math.tanh %78 : vector<8x128xf32>
    %c18_i32 = arith.constant 18 : i32
    %80 = arith.truncf %79 : vector<8x128xf32> to vector<8x128xbf16>
    %cst_26 = arith.constant dense<0.000000e+00> : vector<8x128xf32>
    %81 = tpu.matmul %80, %0, %cst_26 {dimension_numbers = #tpu.dot_dimension_numbers<[1], [0], [0], [1], [0, 0, 1, 1], [], []>} : vector<8x128xbf16>, vector<128x128xbf16>, vector<8x128xf32> -> vector<8x128xf32>
    %82 = arith.addf %81, %6 : vector<8x128xf32>
    %83 = math.tanh %82 : vector<8x128xf32>
    %c19_i32 = arith.constant 19 : i32
    %84 = arith.truncf %83 : vector<8x128xf32> to vector<8x128xbf16>
    %cst_27 = arith.constant dense<0.000000e+00> : vector<8x128xf32>
    %85 = tpu.matmul %84, %0, %cst_27 {dimension_numbers = #tpu.dot_dimension_numbers<[1], [0], [0], [1], [0, 0, 1, 1], [], []>} : vector<8x128xbf16>, vector<128x128xbf16>, vector<8x128xf32> -> vector<8x128xf32>
    %86 = arith.addf %85, %6 : vector<8x128xf32>
    %87 = math.tanh %86 : vector<8x128xf32>
    %c20_i32 = arith.constant 20 : i32
    %88 = arith.truncf %87 : vector<8x128xf32> to vector<8x128xbf16>
    %cst_28 = arith.constant dense<0.000000e+00> : vector<8x128xf32>
    %89 = tpu.matmul %88, %0, %cst_28 {dimension_numbers = #tpu.dot_dimension_numbers<[1], [0], [0], [1], [0, 0, 1, 1], [], []>} : vector<8x128xbf16>, vector<128x128xbf16>, vector<8x128xf32> -> vector<8x128xf32>
    %90 = arith.addf %89, %6 : vector<8x128xf32>
    %91 = math.tanh %90 : vector<8x128xf32>
    %c21_i32 = arith.constant 21 : i32
    %92 = arith.truncf %91 : vector<8x128xf32> to vector<8x128xbf16>
    %cst_29 = arith.constant dense<0.000000e+00> : vector<8x128xf32>
    %93 = tpu.matmul %92, %0, %cst_29 {dimension_numbers = #tpu.dot_dimension_numbers<[1], [0], [0], [1], [0, 0, 1, 1], [], []>} : vector<8x128xbf16>, vector<128x128xbf16>, vector<8x128xf32> -> vector<8x128xf32>
    %94 = arith.addf %93, %6 : vector<8x128xf32>
    %95 = math.tanh %94 : vector<8x128xf32>
    %c22_i32 = arith.constant 22 : i32
    %96 = arith.truncf %95 : vector<8x128xf32> to vector<8x128xbf16>
    %cst_30 = arith.constant dense<0.000000e+00> : vector<8x128xf32>
    %97 = tpu.matmul %96, %0, %cst_30 {dimension_numbers = #tpu.dot_dimension_numbers<[1], [0], [0], [1], [0, 0, 1, 1], [], []>} : vector<8x128xbf16>, vector<128x128xbf16>, vector<8x128xf32> -> vector<8x128xf32>
    %98 = arith.addf %97, %6 : vector<8x128xf32>
    %99 = math.tanh %98 : vector<8x128xf32>
    %c23_i32 = arith.constant 23 : i32
    %100 = arith.truncf %99 : vector<8x128xf32> to vector<8x128xbf16>
    %cst_31 = arith.constant dense<0.000000e+00> : vector<8x128xf32>
    %101 = tpu.matmul %100, %0, %cst_31 {dimension_numbers = #tpu.dot_dimension_numbers<[1], [0], [0], [1], [0, 0, 1, 1], [], []>} : vector<8x128xbf16>, vector<128x128xbf16>, vector<8x128xf32> -> vector<8x128xf32>
    %102 = arith.addf %101, %6 : vector<8x128xf32>
    %103 = math.tanh %102 : vector<8x128xf32>
    %c24_i32 = arith.constant 24 : i32
    %104 = arith.truncf %103 : vector<8x128xf32> to vector<8x128xbf16>
    %cst_32 = arith.constant dense<0.000000e+00> : vector<8x128xf32>
    %105 = tpu.matmul %104, %0, %cst_32 {dimension_numbers = #tpu.dot_dimension_numbers<[1], [0], [0], [1], [0, 0, 1, 1], [], []>} : vector<8x128xbf16>, vector<128x128xbf16>, vector<8x128xf32> -> vector<8x128xf32>
    %106 = arith.addf %105, %6 : vector<8x128xf32>
    %107 = math.tanh %106 : vector<8x128xf32>
    %c25_i32 = arith.constant 25 : i32
    %108 = arith.truncf %107 : vector<8x128xf32> to vector<8x128xbf16>
    %cst_33 = arith.constant dense<0.000000e+00> : vector<8x128xf32>
    %109 = tpu.matmul %108, %0, %cst_33 {dimension_numbers = #tpu.dot_dimension_numbers<[1], [0], [0], [1], [0, 0, 1, 1], [], []>} : vector<8x128xbf16>, vector<128x128xbf16>, vector<8x128xf32> -> vector<8x128xf32>
    %110 = arith.addf %109, %6 : vector<8x128xf32>
    %111 = math.tanh %110 : vector<8x128xf32>
    %c26_i32 = arith.constant 26 : i32
    %112 = arith.truncf %111 : vector<8x128xf32> to vector<8x128xbf16>
    %cst_34 = arith.constant dense<0.000000e+00> : vector<8x128xf32>
    %113 = tpu.matmul %112, %0, %cst_34 {dimension_numbers = #tpu.dot_dimension_numbers<[1], [0], [0], [1], [0, 0, 1, 1], [], []>} : vector<8x128xbf16>, vector<128x128xbf16>, vector<8x128xf32> -> vector<8x128xf32>
    %114 = arith.addf %113, %6 : vector<8x128xf32>
    %115 = math.tanh %114 : vector<8x128xf32>
    %c27_i32 = arith.constant 27 : i32
    %116 = arith.truncf %115 : vector<8x128xf32> to vector<8x128xbf16>
    %cst_35 = arith.constant dense<0.000000e+00> : vector<8x128xf32>
    %117 = tpu.matmul %116, %0, %cst_35 {dimension_numbers = #tpu.dot_dimension_numbers<[1], [0], [0], [1], [0, 0, 1, 1], [], []>} : vector<8x128xbf16>, vector<128x128xbf16>, vector<8x128xf32> -> vector<8x128xf32>
    %118 = arith.addf %117, %6 : vector<8x128xf32>
    %119 = math.tanh %118 : vector<8x128xf32>
    %c28_i32 = arith.constant 28 : i32
    %120 = arith.truncf %119 : vector<8x128xf32> to vector<8x128xbf16>
    %cst_36 = arith.constant dense<0.000000e+00> : vector<8x128xf32>
    %121 = tpu.matmul %120, %0, %cst_36 {dimension_numbers = #tpu.dot_dimension_numbers<[1], [0], [0], [1], [0, 0, 1, 1], [], []>} : vector<8x128xbf16>, vector<128x128xbf16>, vector<8x128xf32> -> vector<8x128xf32>
    %122 = arith.addf %121, %6 : vector<8x128xf32>
    %123 = math.tanh %122 : vector<8x128xf32>
    %c29_i32 = arith.constant 29 : i32
    %124 = arith.truncf %123 : vector<8x128xf32> to vector<8x128xbf16>
    %cst_37 = arith.constant dense<0.000000e+00> : vector<8x128xf32>
    %125 = tpu.matmul %124, %0, %cst_37 {dimension_numbers = #tpu.dot_dimension_numbers<[1], [0], [0], [1], [0, 0, 1, 1], [], []>} : vector<8x128xbf16>, vector<128x128xbf16>, vector<8x128xf32> -> vector<8x128xf32>
    %126 = arith.addf %125, %6 : vector<8x128xf32>
    %127 = math.tanh %126 : vector<8x128xf32>
    %c30_i32 = arith.constant 30 : i32
    %128 = arith.truncf %127 : vector<8x128xf32> to vector<8x128xbf16>
    %cst_38 = arith.constant dense<0.000000e+00> : vector<8x128xf32>
    %129 = tpu.matmul %128, %0, %cst_38 {dimension_numbers = #tpu.dot_dimension_numbers<[1], [0], [0], [1], [0, 0, 1, 1], [], []>} : vector<8x128xbf16>, vector<128x128xbf16>, vector<8x128xf32> -> vector<8x128xf32>
    %130 = arith.addf %129, %6 : vector<8x128xf32>
    %131 = math.tanh %130 : vector<8x128xf32>
    %c31_i32 = arith.constant 31 : i32
    %132 = arith.truncf %131 : vector<8x128xf32> to vector<8x128xbf16>
    %cst_39 = arith.constant dense<0.000000e+00> : vector<8x128xf32>
    %133 = tpu.matmul %132, %0, %cst_39 {dimension_numbers = #tpu.dot_dimension_numbers<[1], [0], [0], [1], [0, 0, 1, 1], [], []>} : vector<8x128xbf16>, vector<128x128xbf16>, vector<8x128xf32> -> vector<8x128xf32>
    %134 = arith.addf %133, %6 : vector<8x128xf32>
    %135 = math.tanh %134 : vector<8x128xf32>
    %c32_i32 = arith.constant 32 : i32
    %136 = arith.truncf %135 : vector<8x128xf32> to vector<8x128xbf16>
    %cst_40 = arith.constant dense<0.000000e+00> : vector<8x128xf32>
    %137 = tpu.matmul %136, %0, %cst_40 {dimension_numbers = #tpu.dot_dimension_numbers<[1], [0], [0], [1], [0, 0, 1, 1], [], []>} : vector<8x128xbf16>, vector<128x128xbf16>, vector<8x128xf32> -> vector<8x128xf32>
    %138 = arith.addf %137, %6 : vector<8x128xf32>
    %139 = math.tanh %138 : vector<8x128xf32>
    %c33_i32 = arith.constant 33 : i32
    %140 = arith.truncf %139 : vector<8x128xf32> to vector<8x128xbf16>
    %cst_41 = arith.constant dense<0.000000e+00> : vector<8x128xf32>
    %141 = tpu.matmul %140, %0, %cst_41 {dimension_numbers = #tpu.dot_dimension_numbers<[1], [0], [0], [1], [0, 0, 1, 1], [], []>} : vector<8x128xbf16>, vector<128x128xbf16>, vector<8x128xf32> -> vector<8x128xf32>
    %142 = arith.addf %141, %6 : vector<8x128xf32>
    %143 = math.tanh %142 : vector<8x128xf32>
    %c34_i32 = arith.constant 34 : i32
    %144 = arith.truncf %143 : vector<8x128xf32> to vector<8x128xbf16>
    %cst_42 = arith.constant dense<0.000000e+00> : vector<8x128xf32>
    %145 = tpu.matmul %144, %0, %cst_42 {dimension_numbers = #tpu.dot_dimension_numbers<[1], [0], [0], [1], [0, 0, 1, 1], [], []>} : vector<8x128xbf16>, vector<128x128xbf16>, vector<8x128xf32> -> vector<8x128xf32>
    %146 = arith.addf %145, %6 : vector<8x128xf32>
    %147 = math.tanh %146 : vector<8x128xf32>
    %c35_i32 = arith.constant 35 : i32
    %148 = arith.truncf %147 : vector<8x128xf32> to vector<8x128xbf16>
    %cst_43 = arith.constant dense<0.000000e+00> : vector<8x128xf32>
    %149 = tpu.matmul %148, %0, %cst_43 {dimension_numbers = #tpu.dot_dimension_numbers<[1], [0], [0], [1], [0, 0, 1, 1], [], []>} : vector<8x128xbf16>, vector<128x128xbf16>, vector<8x128xf32> -> vector<8x128xf32>
    %150 = arith.addf %149, %6 : vector<8x128xf32>
    %151 = math.tanh %150 : vector<8x128xf32>
    %c36_i32 = arith.constant 36 : i32
    %152 = arith.truncf %151 : vector<8x128xf32> to vector<8x128xbf16>
    %cst_44 = arith.constant dense<0.000000e+00> : vector<8x128xf32>
    %153 = tpu.matmul %152, %0, %cst_44 {dimension_numbers = #tpu.dot_dimension_numbers<[1], [0], [0], [1], [0, 0, 1, 1], [], []>} : vector<8x128xbf16>, vector<128x128xbf16>, vector<8x128xf32> -> vector<8x128xf32>
    %154 = arith.addf %153, %6 : vector<8x128xf32>
    %155 = math.tanh %154 : vector<8x128xf32>
    %c37_i32 = arith.constant 37 : i32
    %156 = arith.truncf %155 : vector<8x128xf32> to vector<8x128xbf16>
    %cst_45 = arith.constant dense<0.000000e+00> : vector<8x128xf32>
    %157 = tpu.matmul %156, %0, %cst_45 {dimension_numbers = #tpu.dot_dimension_numbers<[1], [0], [0], [1], [0, 0, 1, 1], [], []>} : vector<8x128xbf16>, vector<128x128xbf16>, vector<8x128xf32> -> vector<8x128xf32>
    %158 = arith.addf %157, %6 : vector<8x128xf32>
    %159 = math.tanh %158 : vector<8x128xf32>
    %c38_i32 = arith.constant 38 : i32
    %160 = arith.truncf %159 : vector<8x128xf32> to vector<8x128xbf16>
    %cst_46 = arith.constant dense<0.000000e+00> : vector<8x128xf32>
    %161 = tpu.matmul %160, %0, %cst_46 {dimension_numbers = #tpu.dot_dimension_numbers<[1], [0], [0], [1], [0, 0, 1, 1], [], []>} : vector<8x128xbf16>, vector<128x128xbf16>, vector<8x128xf32> -> vector<8x128xf32>
    %162 = arith.addf %161, %6 : vector<8x128xf32>
    %163 = math.tanh %162 : vector<8x128xf32>
    %c39_i32 = arith.constant 39 : i32
    %164 = arith.truncf %163 : vector<8x128xf32> to vector<8x128xbf16>
    %cst_47 = arith.constant dense<0.000000e+00> : vector<8x128xf32>
    %165 = tpu.matmul %164, %0, %cst_47 {dimension_numbers = #tpu.dot_dimension_numbers<[1], [0], [0], [1], [0, 0, 1, 1], [], []>} : vector<8x128xbf16>, vector<128x128xbf16>, vector<8x128xf32> -> vector<8x128xf32>
    %166 = arith.addf %165, %6 : vector<8x128xf32>
    %167 = math.tanh %166 : vector<8x128xf32>
    %168 = arith.truncf %167 : vector<8x128xf32> to vector<8x128xbf16>
    %cst_48 = arith.constant dense<0.000000e+00> : vector<8x128xf32>
    %169 = tpu.matmul %168, %0, %cst_48 {dimension_numbers = #tpu.dot_dimension_numbers<[1], [0], [0], [1], [0, 0, 1, 1], [], []>} : vector<8x128xbf16>, vector<128x128xbf16>, vector<8x128xf32> -> vector<8x128xf32>
    %170 = arith.addf %169, %6 : vector<8x128xf32>
    %171 = math.tanh %170 : vector<8x128xf32>
    %172 = arith.subf %171, %167 : vector<8x128xf32>
    %173 = arith.mulf %172, %172 : vector<8x128xf32>
    %174 = vector.shape_cast %173 : vector<8x128xf32> to vector<1x8x128xf32>
    %cst_49 = arith.constant dense<0.000000e+00> : vector<1xf32>
    %175 = vector.multi_reduction <add>, %174, %cst_49 [1, 2] : vector<1x8x128xf32> to vector<1xf32>
    %176 = vector.shape_cast %175 : vector<1xf32> to vector<1x1x1xf32>
    %177 = vector.extract %176[0, 0, 0] : f32 from vector<1x1x1xf32>
    %178 = arith.index_cast %arg0 : i32 to index
    %c0_50 = arith.constant 0 : index
    %179 = memref.load %arg6[%178, %c0_50] : memref<1x1xf32, #tpu.memory_space<smem>>
    memref.store %177, %arg6[%178, %c0_50] : memref<1x1xf32, #tpu.memory_space<smem>>
    %c0_51 = arith.constant 0 : index
    %c0_52 = arith.constant 0 : index
    %180 = vector.load %arg5[%c0_51, %c0_52] : memref<8x128xf32, #tpu.memory_space<vmem>>, vector<8x128xf32>
    tpu.vector_store %arg5[%c0_51, %c0_52], %167 {strides = array<i32>} : memref<8x128xf32, #tpu.memory_space<vmem>>, vector<8x128xf32>,
    return
  }
  func.func @transform_0(%arg0: i32) -> (i32, i32) {
    %c0_i32 = arith.constant 0 : i32
    %c0_i32_0 = arith.constant 0 : i32
    return %arg0, %c0_i32 : i32, i32
  }
  func.func @transform_1(%arg0: i32) -> (i32, i32) {
    %c0_i32 = arith.constant 0 : i32
    %c0_i32_0 = arith.constant 0 : i32
    %c0_i32_1 = arith.constant 0 : i32
    return %c0_i32, %c0_i32_0 : i32, i32
  }
  func.func @transform_2(%arg0: i32) -> (i32, i32) {
    %c0_i32 = arith.constant 0 : i32
    %c0_i32_0 = arith.constant 0 : i32
    %c0_i32_1 = arith.constant 0 : i32
    return %c0_i32, %c0_i32_0 : i32, i32
  }
  func.func @transform_3(%arg0: i32) -> (i32, i32) {
    %c0_i32 = arith.constant 0 : i32
    %c0_i32_0 = arith.constant 0 : i32
    %c0_i32_1 = arith.constant 0 : i32
    return %c0_i32, %c0_i32_0 : i32, i32
  }
  func.func @transform_4(%arg0: i32) -> (i32, i32) {
    %c0_i32 = arith.constant 0 : i32
    %c0_i32_0 = arith.constant 0 : i32
    return %arg0, %c0_i32 : i32, i32
  }
  func.func @transform_5(%arg0: i32) -> (i32, i32) {
    %c0_i32 = arith.constant 0 : i32
    %c0_i32_0 = arith.constant 0 : i32
    %c0_i32_1 = arith.constant 0 : i32
    return %c0_i32, %c0_i32_0 : i32, i32
  }
}

</mosaic_0001>

<llo_original>
// kernel: tpu_custom_call.1
$region0: #{tpu_custom_call.1}
  #allocation0 [shape = 'u32[]', space=smem, size = 0x4, offset = 0x4, fixed_abs, tag = 'smem constant byte address 0x4 - core index']
  #allocation1 [shape = 'u32[144,128]{1,0:T(1,128)}', space=vmem, size = 0x12000, scoped, tag = 'internal scratch']
  %s0 = inlined_call_operand.hbm [shape: bf16[8,128], index: 0, kind: input, shape index: {}]
  %s1 = inlined_call_operand.hbm [shape: bf16[128,128], index: 1, kind: input, shape index: {}]
  %s2 = inlined_call_operand.hbm [shape: bf16[128,128], index: 2, kind: input, shape index: {}]
  %s3 = inlined_call_operand.vmem [shape: f32[1,128], index: 3, kind: input, shape index: {}]
  %s4 = inlined_call_operand.hbm [shape: f32[8,128], index: 4, kind: output, shape index: {0}]
  %s5 = inlined_call_operand.hbm [shape: f32[1,1], index: 5, kind: output, shape index: {1}]
  %6 = xla_tuple %s4, %s5
  %s7 = sld [smem:[#allocation0]]
  $region46: #{tpu_custom_call.1} parent=0
    _
  %s9 = ssub.s32 1, %s7
  %s10 = scalar_select 0, %s9, %s7
  $region1: #{tpu_custom_call.1} parent=0
    #allocation2 [shape = 'u8[2048]{0}', space=vmem, size = 0x800, scoped, tag = 'input window, operand 0, single buffered']
    #allocation3 [shape = 's32[1]{0}', space=sflag, size = 0x4, scoped, tag = 'scoped memory for tpu_custom_call.1']
    #allocation4 [shape = 's32[1]{0}', space=sflag, size = 0x4, scoped, tag = 'scoped memory for tpu_custom_call.1']
    #allocation5 [shape = 's32[1]{0}', space=sflag, size = 0x4, scoped, tag = 'scoped memory for tpu_custom_call.1']
    #allocation6 [shape = 'u8[32768]{0}', space=vmem, size = 0x8000, scoped, tag = 'input window, operand 1, single buffered']
    #allocation7 [shape = 's32[1]{0}', space=sflag, size = 0x4, scoped, tag = 'scoped memory for tpu_custom_call.1']
    #allocation8 [shape = 'u8[32768]{0}', space=vmem, size = 0x8000, scoped, tag = 'input window, operand 2, single buffered']
    #allocation9 [shape = 'u8[4096]{0}', space=vmem, size = 0x1000, scoped, tag = 'output window, operand 0, single buffered']
    #allocation10 [shape = 'u8[512]{0}', space=smem, size = 0x200, scoped, tag = 'output window, operand 1, single buffered']
    %11 = vsyncpa [#allocation3], 0
    %12 = vsyncpa [#allocation7], 0
    %13 = vsyncpa [#allocation4], 0
    %14 = vsyncpa [#allocation5], 0
    // Predicated region
    $region2: #{tpu_custom_call.1} parent=1 // pred_check
      _
    $region3: #{tpu_custom_call.1} parent=1 // pred_check_branch
      %16 = sbr.rel (0) target = $region5
    $region4: #{tpu_custom_call.1} parent=1 // pred_region
      %s18 = ssub.s32 64, 64
      %19 = vsyncadd [#allocation3], %s18
      %s21 = sshll.u32 [#allocation2], 4
      %s22 = int_to_ptr.vmem [resolvable:$true] %s21
      %24 = dma.hbm_to_vmem [thread:$0]  %s0, 64, %s22, [#allocation3]
    $region5: #{tpu_custom_call.1} parent=1 // pred_fallthru
      _
    // Predicated region
    $region6: #{tpu_custom_call.1} parent=1 // pred_check
      _
    $region7: #{tpu_custom_call.1} parent=1 // pred_check_branch
      %26 = sbr.rel (0) target = $region9
    $region8: #{tpu_custom_call.1} parent=1 // pred_region
      %s28 = ssub.s32 1024, 1024
      %29 = vsyncadd [#allocation7], %s28
      %s30 = sshll.u32 [#allocation6], 4
      %s31 = int_to_ptr.vmem [resolvable:$true] %s30
      %36 = dma.hbm_to_vmem [thread:$0]  %s1, 1024, %s31, [#allocation7], 64, 64, 4
    $region9: #{tpu_custom_call.1} parent=1 // pred_fallthru
      _
    // Predicated region
    $region10: #{tpu_custom_call.1} parent=1 // pred_check
      _
    $region11: #{tpu_custom_call.1} parent=1 // pred_check_branch
      %38 = sbr.rel (0) target = $region13
    $region12: #{tpu_custom_call.1} parent=1 // pred_region
      %s40 = ssub.s32 1024, 1024
      %41 = vsyncadd [#allocation7], %s40
      %s42 = sshll.u32 [#allocation8], 4
      %s43 = int_to_ptr.vmem [resolvable:$true] %s42
      %48 = dma.hbm_to_vmem [thread:$0]  %s2, 1024, %s43, [#allocation7], 64, 64, 4
    $region13: #{tpu_custom_call.1} parent=1 // pred_fallthru
      _
    // Predicated region
    $region14: #{tpu_custom_call.1} parent=1 // pred_check
      _
    $region15: #{tpu_custom_call.1} parent=1 // pred_check_branch
      %50 = sbr.rel (0) target = $region17
    $region16: #{tpu_custom_call.1} parent=1 // pred_region
      _
    $region17: #{tpu_custom_call.1} parent=1 // pred_fallthru
      _
    // Predicated region
    $region18: #{tpu_custom_call.1} parent=1 // pred_check
      _
    $region19: #{tpu_custom_call.1} parent=1 // pred_check_branch
      %52 = sbr.rel (0) target = $region21
    $region20: #{tpu_custom_call.1} parent=1 // pred_region
      %53 = dma.done [#allocation3], 64
    $region21: #{tpu_custom_call.1} parent=1 // pred_fallthru
      _
    // Predicated region
    $region22: #{tpu_custom_call.1} parent=1 // pred_check
      _
    $region23: #{tpu_custom_call.1} parent=1 // pred_check_branch
      %55 = sbr.rel (0) target = $region25
    $region24: #{tpu_custom_call.1} parent=1 // pred_region
      %56 = dma.done [#allocation7], 1024
    $region25: #{tpu_custom_call.1} parent=1 // pred_fallthru
      _
    // Predicated region
    $region26: #{tpu_custom_call.1} parent=1 // pred_check
      _
    $region27: #{tpu_custom_call.1} parent=1 // pred_check_branch
      %58 = sbr.rel (0) target = $region29
    $region28: #{tpu_custom_call.1} parent=1 // pred_region
      %59 = dma.done [#allocation7], 1024
    $region29: #{tpu_custom_call.1} parent=1 // pred_fallthru
      _
    %v61 = vld [vmem:[#allocation6] sm:$0xf]
    %v62 = vld [vmem:[#allocation6 + $0x4] sm:$0xf]
    %v63 = vld [vmem:[#allocation6 + $0x8] sm:$0xf]
    %v64 = vld [vmem:[#allocation6 + $0xc] sm:$0xf]
    %v65 = vld [vmem:[#allocation6 + $0x10] sm:$0xf]
    %v66 = vld [vmem:[#allocation6 + $0x14] sm:$0xf]
    %v67 = vld [vmem:[#allocation6 + $0x18] sm:$0xf]
    %v68 = vld [vmem:[#allocation6 + $0x1c] sm:$0xf]
    %v69 = vld [vmem:[#allocation6 + $0x20] sm:$0xf]
    %v70 = vld [vmem:[#allocation6 + $0x24] sm:$0xf]
    %v71 = vld [vmem:[#allocation6 + $0x28] sm:$0xf]
    %v72 = vld [vmem:[#allocation6 + $0x2c] sm:$0xf]
    %v73 = vld [vmem:[#allocation6 + $0x30] sm:$0xf]
    %v74 = vld [vmem:[#allocation6 + $0x34] sm:$0xf]
    %v75 = vld [vmem:[#allocation6 + $0x38] sm:$0xf]
    %v76 = vld [vmem:[#allocation6 + $0x3c] sm:$0xf]
    %v77 = vld [vmem:[#allocation2] sm:$0xf]
    %v78 = vld [vmem:[#allocation8] sm:$0xf]
    %v79 = vld [vmem:[#allocation8 + $0x4] sm:$0xf]
    %v80 = vld [vmem:[#allocation8 + $0x8] sm:$0xf]
    %v81 = vld [vmem:[#allocation8 + $0xc] sm:$0xf]
    %v82 = vld [vmem:[#allocation8 + $0x10] sm:$0xf]
    %v83 = vld [vmem:[#allocation8 + $0x14] sm:$0xf]
    %v84 = vld [vmem:[#allocation8 + $0x18] sm:$0xf]
    %v85 = vld [vmem:[#allocation8 + $0x1c] sm:$0xf]
    %v86 = vld [vmem:[#allocation8 + $0x20] sm:$0xf]
    %v87 = vld [vmem:[#allocation8 + $0x24] sm:$0xf]
    %v88 = vld [vmem:[#allocation8 + $0x28] sm:$0xf]
    %v89 = vld [vmem:[#allocation8 + $0x2c] sm:$0xf]
    %v90 = vld [vmem:[#allocation8 + $0x30] sm:$0xf]
    %v91 = vld [vmem:[#allocation8 + $0x34] sm:$0xf]
    %v92 = vld [vmem:[#allocation8 + $0x38] sm:$0xf]
    %v93 = vld [vmem:[#allocation8 + $0x3c] sm:$0xf]
    %v94 = vld [vmem:[%s3] sm:$0x1]
    %v96 = vlaneseq
    %v97 = vshrl.u32 %v96, 7
    %v98 = vsub.s32 0, %v97
    %v99 = vrot.slane %v94, %v98
    %v117 = vunpack.c.l.b16 %v78
    %v118 = vunpack.c.l.b16 %v79
    %v119 = vunpack.c.l.b16 %v80
    %v120 = vunpack.c.l.b16 %v81
    %v121 = vunpack.c.l.b16 %v82
    %v122 = vunpack.c.l.b16 %v83
    %v123 = vunpack.c.l.b16 %v84
    %v124 = vunpack.c.l.b16 %v85
    %v125 = vunpack.c.l.b16 %v86
    %v126 = vunpack.c.l.b16 %v87
    %v127 = vunpack.c.l.b16 %v88
    %v128 = vunpack.c.l.b16 %v89
    %v129 = vunpack.c.l.b16 %v90
    %v130 = vunpack.c.l.b16 %v91
    %v131 = vunpack.c.l.b16 %v92
    %v132 = vunpack.c.l.b16 %v93
    %v133 = vpack.c.b16 %v118, %v117
    %v134 = vpack.c.b16 %v120, %v119
    %v135 = vpack.c.b16 %v122, %v121
    %v136 = vpack.c.b16 %v124, %v123
    %v137 = vpack.c.b16 %v126, %v125
    %v138 = vpack.c.b16 %v128, %v127
    %v139 = vpack.c.b16 %v130, %v129
    %v140 = vpack.c.b16 %v132, %v131
    %149 = vmatprep.subr.bf16.mxu0 0
    %150 = vmatpush1.bf16.msra.mxu0 %v133
    %151 = vmatprep.subr.bf16.mxu0 0
    %152 = vmatpush1.bf16.msra.mxu0 %v134
    %153 = vmatprep.subr.bf16.mxu0 0
    %154 = vmatpush1.bf16.msra.mxu0 %v135
    %155 = vmatprep.subr.bf16.mxu0 0
    %156 = vmatpush1.bf16.msra.mxu0 %v136
    %157 = vmatprep.subr.bf16.mxu0 0
    %158 = vmatpush1.bf16.msra.mxu0 %v137
    %159 = vmatprep.subr.bf16.mxu0 0
    %160 = vmatpush1.bf16.msra.mxu0 %v138
    %161 = vmatprep.subr.bf16.mxu0 0
    %162 = vmatpush1.bf16.msra.mxu0 %v139
    %163 = vmatprep.subr.bf16.mxu0 0
    %164 = vmatpush1.bf16.msra.mxu0 %v140
    %165 = vmatprep.subr.bf16.mxu0 0
    %166 = vmatpush1.bf16.msra.mxu0 0
    %167 = vmatprep.subr.bf16.mxu0 0
    %168 = vmatpush1.bf16.msra.mxu0 0
    %169 = vmatprep.subr.bf16.mxu0 0
    %170 = vmatpush1.bf16.msra.mxu0 0
    %171 = vmatprep.subr.bf16.mxu0 0
    %172 = vmatpush1.bf16.msra.mxu0 0
    %173 = vmatprep.subr.bf16.mxu0 0
    %174 = vmatpush1.bf16.msra.mxu0 0
    %175 = vmatprep.subr.bf16.mxu0 0
    %176 = vmatpush1.bf16.msra.mxu0 0
    %177 = vmatprep.subr.bf16.mxu0 0
    %178 = vmatpush1.bf16.msra.mxu0 0
    %179 = vmatprep.subr.bf16.mxu0 0
    %180 = vmatpush1.bf16.msra.mxu0 0
    %181 = vmatprep.mubr.bf16.mxu0 0
    %182 = vmatmul.mubr.bf16.gmra.mrb[0].mxu0 %v77
    %v183 = vpop.f32.mrb[0].mxu0
    %v184 = vadd.f32 %v99, %v183
    %v185 = vpop.f32.mrb[0].mxu0
    %v186 = vpop.f32.mrb[0].mxu0
    %v187 = vpop.f32.mrb[0].mxu0
    %188 = vdwg.mxu0
    %v205 = vunpack.c.l.b16 %v61
    %v206 = vunpack.c.l.b16 %v62
    %v207 = vunpack.c.l.b16 %v63
    %v208 = vunpack.c.l.b16 %v64
    %v209 = vunpack.c.l.b16 %v65
    %v210 = vunpack.c.l.b16 %v66
    %v211 = vunpack.c.l.b16 %v67
    %v212 = vunpack.c.l.b16 %v68
    %v213 = vunpack.c.l.b16 %v69
    %v214 = vunpack.c.l.b16 %v70
    %v215 = vunpack.c.l.b16 %v71
    %v216 = vunpack.c.l.b16 %v72
    %v217 = vunpack.c.l.b16 %v73
    %v218 = vunpack.c.l.b16 %v74
    %v219 = vunpack.c.l.b16 %v75
    %v220 = vunpack.c.l.b16 %v76
    %v221 = vpack.c.b16 %v206, %v205
    %v222 = vpack.c.b16 %v208, %v207
    %v223 = vpack.c.b16 %v210, %v209
    %v224 = vpack.c.b16 %v212, %v211
    %v225 = vpack.c.b16 %v214, %v213
    %v226 = vpack.c.b16 %v216, %v215
    %v227 = vpack.c.b16 %v218, %v217
    %v228 = vpack.c.b16 %v220, %v219
    %237 = vmatprep.subr.bf16.mxu0 0
    %238 = vmatpush1.bf16.msra.mxu0 %v221
    %239 = vmatprep.subr.bf16.mxu0 0
    %240 = vmatpush1.bf16.msra.mxu0 %v222
    %241 = vmatprep.subr.bf16.mxu0 0
    %242 = vmatpush1.bf16.msra.mxu0 %v223
    %243 = vmatprep.subr.bf16.mxu0 0
    %244 = vmatpush1.bf16.msra.mxu0 %v224
    %245 = vmatprep.subr.bf16.mxu0 0
    %246 = vmatpush1.bf16.msra.mxu0 %v225
    %247 = vmatprep.subr.bf16.mxu0 0
    %248 = vmatpush1.bf16.msra.mxu0 %v226
    %249 = vmatprep.subr.bf16.mxu0 0
    %250 = vmatpush1.bf16.msra.mxu0 %v227
    %251 = vmatprep.subr.bf16.mxu0 0
    %252 = vmatpush1.bf16.msra.mxu0 %v228
    %253 = vmatprep.subr.bf16.mxu0 0
    %254 = vmatpush1.bf16.msra.mxu0 0
    %255 = vmatprep.subr.bf16.mxu0 0
    %256 = vmatpush1.bf16.msra.mxu0 0
    %257 = vmatprep.subr.bf16.mxu0 0
    %258 = vmatpush1.bf16.msra.mxu0 0
    %259 = vmatprep.subr.bf16.mxu0 0
    %260 = vmatpush1.bf16.msra.mxu0 0
    %261 = vmatprep.subr.bf16.mxu0 0
    %262 = vmatpush1.bf16.msra.mxu0 0
    %263 = vmatprep.subr.bf16.mxu0 0
    %264 = vmatpush1.bf16.msra.mxu0 0
    %265 = vmatprep.subr.bf16.mxu0 0
    %266 = vmatpush1.bf16.msra.mxu0 0
    %267 = vmatprep.subr.bf16.mxu0 0
    %268 = vmatpush1.bf16.msra.mxu0 0
    %269 = vmatprep.mubr.bf16.mxu0 0
    %270 = vmatmul.mubr.bf16.gmra.mrb[0].mxu0 0
    %v271 = vpop.f32.mrb[0].mxu0
    %v272 = vadd.f32 %v184, %v271
    %v273 = vpop.f32.mrb[0].mxu0
    %v274 = vpop.f32.mrb[0].mxu0
    %v275 = vpop.f32.mrb[0].mxu0
    %276 = vdwg.mxu0
    %v277 = vtanh.pop %v272
    %v278 = vpack.c.bf16 %v277, %v277
    %279 = vmatprep.subr.bf16.mxu0 0
    %280 = vmatpush1.bf16.msra.mxu0 %v221
    %281 = vmatprep.subr.bf16.mxu0 0
    %282 = vmatpush1.bf16.msra.mxu0 %v222
    %283 = vmatprep.subr.bf16.mxu0 0
    %284 = vmatpush1.bf16.msra.mxu0 %v223
    %285 = vmatprep.subr.bf16.mxu0 0
    %286 = vmatpush1.bf16.msra.mxu0 %v224
    %287 = vmatprep.subr.bf16.mxu0 0
    %288 = vmatpush1.bf16.msra.mxu0 %v225
    %289 = vmatprep.subr.bf16.mxu0 0
    %290 = vmatpush1.bf16.msra.mxu0 %v226
    %291 = vmatprep.subr.bf16.mxu0 0
    %292 = vmatpush1.bf16.msra.mxu0 %v227
    %293 = vmatprep.subr.bf16.mxu0 0
    %294 = vmatpush1.bf16.msra.mxu0 %v228
    %295 = vmatprep.subr.bf16.mxu0 0
    %296 = vmatpush1.bf16.msra.mxu0 0
    %297 = vmatprep.subr.bf16.mxu0 0
    %298 = vmatpush1.bf16.msra.mxu0 0
    %299 = vmatprep.subr.bf16.mxu0 0
    %300 = vmatpush1.bf16.msra.mxu0 0
    %301 = vmatprep.subr.bf16.mxu0 0
    %302 = vmatpush1.bf16.msra.mxu0 0
    %303 = vmatprep.subr.bf16.mxu0 0
    %304 = vmatpush1.bf16.msra.mxu0 0
    %305 = vmatprep.subr.bf16.mxu0 0
    %306 = vmatpush1.bf16.msra.mxu0 0
    %307 = vmatprep.subr.bf16.mxu0 0
    %308 = vmatpush1.bf16.msra.mxu0 0
    %309 = vmatprep.subr.bf16.mxu0 0
    %310 = vmatpush1.bf16.msra.mxu0 0
    %311 = vmatprep.mubr.bf16.mxu0 0
    %312 = vmatmul.mubr.bf16.gmra.mrb[0].mxu0 %v278
    %v313 = vpop.f32.mrb[0].mxu0
    %v314 = vadd.f32 %v184, %v313
    %v315 = vpop.f32.mrb[0].mxu0
    %v316 = vpop.f32.mrb[0].mxu0
    %v317 = vpop.f32.mrb[0].mxu0
    %318 = vdwg.mxu0
    %v319 = vtanh.pop %v314
    %v320 = vpack.c.bf16 %v319, %v319
    %321 = vmatprep.subr.bf16.mxu0 0
    %322 = vmatpush1.bf16.msra.mxu0 %v221
    %323 = vmatprep.subr.bf16.mxu0 0
    %324 = vmatpush1.bf16.msra.mxu0 %v222
    %325 = vmatprep.subr.bf16.mxu0 0
    %326 = vmatpush1.bf16.msra.mxu0 %v223
    %327 = vmatprep.subr.bf16.mxu0 0
    %328 = vmatpush1.bf16.msra.mxu0 %v224
    %329 = vmatprep.subr.bf16.mxu0 0
    %330 = vmatpush1.bf16.msra.mxu0 %v225
    %331 = vmatprep.subr.bf16.mxu0 0
    %332 = vmatpush1.bf16.msra.mxu0 %v226
    %333 = vmatprep.subr.bf16.mxu0 0
    %334 = vmatpush1.bf16.msra.mxu0 %v227
    %335 = vmatprep.subr.bf16.mxu0 0
    %336 = vmatpush1.bf16.msra.mxu0 %v228
    %337 = vmatprep.subr.bf16.mxu0 0
    %338 = vmatpush1.bf16.msra.mxu0 0
    %339 = vmatprep.subr.bf16.mxu0 0
    %340 = vmatpush1.bf16.msra.mxu0 0
    %341 = vmatprep.subr.bf16.mxu0 0
    %342 = vmatpush1.bf16.msra.mxu0 0
    %343 = vmatprep.subr.bf16.mxu0 0
    %344 = vmatpush1.bf16.msra.mxu0 0
    %345 = vmatprep.subr.bf16.mxu0 0
    %346 = vmatpush1.bf16.msra.mxu0 0
    %347 = vmatprep.subr.bf16.mxu0 0
    %348 = vmatpush1.bf16.msra.mxu0 0
    %349 = vmatprep.subr.bf16.mxu0 0
    %350 = vmatpush1.bf16.msra.mxu0 0
    %351 = vmatprep.subr.bf16.mxu0 0
    %352 = vmatpush1.bf16.msra.mxu0 0
    %353 = vmatprep.mubr.bf16.mxu0 0
    %354 = vmatmul.mubr.bf16.gmra.mrb[0].mxu0 %v320
    %v355 = vpop.f32.mrb[0].mxu0
    %v356 = vadd.f32 %v184, %v355
    %v357 = vpop.f32.mrb[0].mxu0
    %v358 = vpop.f32.mrb[0].mxu0
    %v359 = vpop.f32.mrb[0].mxu0
    %360 = vdwg.mxu0
    %v361 = vtanh.pop %v356
    %v362 = vpack.c.bf16 %v361, %v361
    %363 = vmatprep.subr.bf16.mxu0 0
    %364 = vmatpush1.bf16.msra.mxu0 %v221
    %365 = vmatprep.subr.bf16.mxu0 0
    %366 = vmatpush1.bf16.msra.mxu0 %v222
    %367 = vmatprep.subr.bf16.mxu0 0
    %368 = vmatpush1.bf16.msra.mxu0 %v223
    %369 = vmatprep.subr.bf16.mxu0 0
    %370 = vmatpush1.bf16.msra.mxu0 %v224
    %371 = vmatprep.subr.bf16.mxu0 0
    %372 = vmatpush1.bf16.msra.mxu0 %v225
    %373 = vmatprep.subr.bf16.mxu0 0
    %374 = vmatpush1.bf16.msra.mxu0 %v226
    %375 = vmatprep.subr.bf16.mxu0 0
    %376 = vmatpush1.bf16.msra.mxu0 %v227
    %377 = vmatprep.subr.bf16.mxu0 0
    %378 = vmatpush1.bf16.msra.mxu0 %v228
    %379 = vmatprep.subr.bf16.mxu0 0
    %380 = vmatpush1.bf16.msra.mxu0 0
    %381 = vmatprep.subr.bf16.mxu0 0
    %382 = vmatpush1.bf16.msra.mxu0 0
    %383 = vmatprep.subr.bf16.mxu0 0
    %384 = vmatpush1.bf16.msra.mxu0 0
    %385 = vmatprep.subr.bf16.mxu0 0
    %386 = vmatpush1.bf16.msra.mxu0 0
    %387 = vmatprep.subr.bf16.mxu0 0
    %388 = vmatpush1.bf16.msra.mxu0 0
    %389 = vmatprep.subr.bf16.mxu0 0
    %390 = vmatpush1.bf16.msra.mxu0 0
    %391 = vmatprep.subr.bf16.mxu0 0
    %392 = vmatpush1.bf16.msra.mxu0 0
    %393 = vmatprep.subr.bf16.mxu0 0
    %394 = vmatpush1.bf16.msra.mxu0 0
    %395 = vmatprep.mubr.bf16.mxu0 0
    %396 = vmatmul.mubr.bf16.gmra.mrb[0].mxu0 %v362
    %v397 = vpop.f32.mrb[0].mxu0
    %v398 = vadd.f32 %v184, %v397
    %v399 = vpop.f32.mrb[0].mxu0
    %v400 = vpop.f32.mrb[0].mxu0
    %v401 = vpop.f32.mrb[0].mxu0
    %402 = vdwg.mxu0
    %v403 = vtanh.pop %v398
    %v404 = vpack.c.bf16 %v403, %v403
    %405 = vmatprep.subr.bf16.mxu0 0
    %406 = vmatpush1.bf16.msra.mxu0 %v221
    %407 = vmatprep.subr.bf16.mxu0 0
    %408 = vmatpush1.bf16.msra.mxu0 %v222
    %409 = vmatprep.subr.bf16.mxu0 0
    %410 = vmatpush1.bf16.msra.mxu0 %v223
    %411 = vmatprep.subr.bf16.mxu0 0
    %412 = vmatpush1.bf16.msra.mxu0 %v224
    %413 = vmatprep.subr.bf16.mxu0 0
    %414 = vmatpush1.bf16.msra.mxu0 %v225
    %415 = vmatprep.subr.bf16.mxu0 0
    %416 = vmatpush1.bf16.msra.mxu0 %v226
    %417 = vmatprep.subr.bf16.mxu0 0
    %418 = vmatpush1.bf16.msra.mxu0 %v227
    %419 = vmatprep.subr.bf16.mxu0 0
    %420 = vmatpush1.bf16.msra.mxu0 %v228
    %421 = vmatprep.subr.bf16.mxu0 0
    %422 = vmatpush1.bf16.msra.mxu0 0
    %423 = vmatprep.subr.bf16.mxu0 0
    %424 = vmatpush1.bf16.msra.mxu0 0
    %425 = vmatprep.subr.bf16.mxu0 0
    %426 = vmatpush1.bf16.msra.mxu0 0
    %427 = vmatprep.subr.bf16.mxu0 0
    %428 = vmatpush1.bf16.msra.mxu0 0
    %429 = vmatprep.subr.bf16.mxu0 0
    %430 = vmatpush1.bf16.msra.mxu0 0
    %431 = vmatprep.subr.bf16.mxu0 0
    %432 = vmatpush1.bf16.msra.mxu0 0
    %433 = vmatprep.subr.bf16.mxu0 0
    %434 = vmatpush1.bf16.msra.mxu0 0
    %435 = vmatprep.subr.bf16.mxu0 0
    %436 = vmatpush1.bf16.msra.mxu0 0
    %437 = vmatprep.mubr.bf16.mxu0 0
    %438 = vmatmul.mubr.bf16.gmra.mrb[0].mxu0 %v404
    %v439 = vpop.f32.mrb[0].mxu0
    %v440 = vadd.f32 %v184, %v439
    %v441 = vpop.f32.mrb[0].mxu0
    %v442 = vpop.f32.mrb[0].mxu0
    %v443 = vpop.f32.mrb[0].mxu0
    %444 = vdwg.mxu0
    %v445 = vtanh.pop %v440
    %v446 = vpack.c.bf16 %v445, %v445
    %447 = vmatprep.subr.bf16.mxu0 0
    %448 = vmatpush1.bf16.msra.mxu0 %v221
    %449 = vmatprep.subr.bf16.mxu0 0
    %450 = vmatpush1.bf16.msra.mxu0 %v222
    %451 = vmatprep.subr.bf16.mxu0 0
    %452 = vmatpush1.bf16.msra.mxu0 %v223
    %453 = vmatprep.subr.bf16.mxu0 0
    %454 = vmatpush1.bf16.msra.mxu0 %v224
    %455 = vmatprep.subr.bf16.mxu0 0
    %456 = vmatpush1.bf16.msra.mxu0 %v225
    %457 = vmatprep.subr.bf16.mxu0 0
    %458 = vmatpush1.bf16.msra.mxu0 %v226
    %459 = vmatprep.subr.bf16.mxu0 0
    %460 = vmatpush1.bf16.msra.mxu0 %v227
    %461 = vmatprep.subr.bf16.mxu0 0
    %462 = vmatpush1.bf16.msra.mxu0 %v228
    %463 = vmatprep.subr.bf16.mxu0 0
    %464 = vmatpush1.bf16.msra.mxu0 0
    %465 = vmatprep.subr.bf16.mxu0 0
    %466 = vmatpush1.bf16.msra.mxu0 0
    %467 = vmatprep.subr.bf16.mxu0 0
    %468 = vmatpush1.bf16.msra.mxu0 0
    %469 = vmatprep.subr.bf16.mxu0 0
    %470 = vmatpush1.bf16.msra.mxu0 0
    %471 = vmatprep.subr.bf16.mxu0 0
    %472 = vmatpush1.bf16.msra.mxu0 0
    %473 = vmatprep.subr.bf16.mxu0 0
    %474 = vmatpush1.bf16.msra.mxu0 0
    %475 = vmatprep.subr.bf16.mxu0 0
    %476 = vmatpush1.bf16.msra.mxu0 0
    %477 = vmatprep.subr.bf16.mxu0 0
    %478 = vmatpush1.bf16.msra.mxu0 0
    %479 = vmatprep.mubr.bf16.mxu0 0
    %480 = vmatmul.mubr.bf16.gmra.mrb[0].mxu0 %v446
    %v481 = vpop.f32.mrb[0].mxu0
    %v482 = vadd.f32 %v184, %v481
    %v483 = vpop.f32.mrb[0].mxu0
    %v484 = vpop.f32.mrb[0].mxu0
    %v485 = vpop.f32.mrb[0].mxu0
    %486 = vdwg.mxu0
    %v487 = vtanh.pop %v482
    %v488 = vpack.c.bf16 %v487, %v487
    %489 = vmatprep.subr.bf16.mxu0 0
    %490 = vmatpush1.bf16.msra.mxu0 %v221
    %491 = vmatprep.subr.bf16.mxu0 0
    %492 = vmatpush1.bf16.msra.mxu0 %v222
    %493 = vmatprep.subr.bf16.mxu0 0
    %494 = vmatpush1.bf16.msra.mxu0 %v223
    %495 = vmatprep.subr.bf16.mxu0 0
    %496 = vmatpush1.bf16.msra.mxu0 %v224
    %497 = vmatprep.subr.bf16.mxu0 0
    %498 = vmatpush1.bf16.msra.mxu0 %v225
    %499 = vmatprep.subr.bf16.mxu0 0
    %500 = vmatpush1.bf16.msra.mxu0 %v226
    %501 = vmatprep.subr.bf16.mxu0 0
    %502 = vmatpush1.bf16.msra.mxu0 %v227
    %503 = vmatprep.subr.bf16.mxu0 0
    %504 = vmatpush1.bf16.msra.mxu0 %v228
    %505 = vmatprep.subr.bf16.mxu0 0
    %506 = vmatpush1.bf16.msra.mxu0 0
    %507 = vmatprep.subr.bf16.mxu0 0
    %508 = vmatpush1.bf16.msra.mxu0 0
    %509 = vmatprep.subr.bf16.mxu0 0
    %510 = vmatpush1.bf16.msra.mxu0 0
    %511 = vmatprep.subr.bf16.mxu0 0
    %512 = vmatpush1.bf16.msra.mxu0 0
    %513 = vmatprep.subr.bf16.mxu0 0
    %514 = vmatpush1.bf16.msra.mxu0 0
    %515 = vmatprep.subr.bf16.mxu0 0
    %516 = vmatpush1.bf16.msra.mxu0 0
    %517 = vmatprep.subr.bf16.mxu0 0
    %518 = vmatpush1.bf16.msra.mxu0 0
    %519 = vmatprep.subr.bf16.mxu0 0
    %520 = vmatpush1.bf16.msra.mxu0 0
    %521 = vmatprep.mubr.bf16.mxu0 0
    %522 = vmatmul.mubr.bf16.gmra.mrb[0].mxu0 %v488
    %v523 = vpop.f32.mrb[0].mxu0
    %v524 = vadd.f32 %v184, %v523
    %v525 = vpop.f32.mrb[0].mxu0
    %v526 = vpop.f32.mrb[0].mxu0
    %v527 = vpop.f32.mrb[0].mxu0
    %528 = vdwg.mxu0
    %v529 = vtanh.pop %v524
    %v530 = vpack.c.bf16 %v529, %v529
    %531 = vmatprep.subr.bf16.mxu0 0
    %532 = vmatpush1.bf16.msra.mxu0 %v221
    %533 = vmatprep.subr.bf16.mxu0 0
    %534 = vmatpush1.bf16.msra.mxu0 %v222
    %535 = vmatprep.subr.bf16.mxu0 0
    %536 = vmatpush1.bf16.msra.mxu0 %v223
    %537 = vmatprep.subr.bf16.mxu0 0
    %538 = vmatpush1.bf16.msra.mxu0 %v224
    %539 = vmatprep.subr.bf16.mxu0 0
    %540 = vmatpush1.bf16.msra.mxu0 %v225
    %541 = vmatprep.subr.bf16.mxu0 0
    %542 = vmatpush1.bf16.msra.mxu0 %v226
    %543 = vmatprep.subr.bf16.mxu0 0
    %544 = vmatpush1.bf16.msra.mxu0 %v227
    %545 = vmatprep.subr.bf16.mxu0 0
    %546 = vmatpush1.bf16.msra.mxu0 %v228
    %547 = vmatprep.subr.bf16.mxu0 0
    %548 = vmatpush1.bf16.msra.mxu0 0
    %549 = vmatprep.subr.bf16.mxu0 0
    %550 = vmatpush1.bf16.msra.mxu0 0
    %551 = vmatprep.subr.bf16.mxu0 0
    %552 = vmatpush1.bf16.msra.mxu0 0
    %553 = vmatprep.subr.bf16.mxu0 0
    %554 = vmatpush1.bf16.msra.mxu0 0
    %555 = vmatprep.subr.bf16.mxu0 0
    %556 = vmatpush1.bf16.msra.mxu0 0
    %557 = vmatprep.subr.bf16.mxu0 0
    %558 = vmatpush1.bf16.msra.mxu0 0
    %559 = vmatprep.subr.bf16.mxu0 0
    %560 = vmatpush1.bf16.msra.mxu0 0
    %561 = vmatprep.subr.bf16.mxu0 0
    %562 = vmatpush1.bf16.msra.mxu0 0
    %563 = vmatprep.mubr.bf16.mxu0 0
    %564 = vmatmul.mubr.bf16.gmra.mrb[0].mxu0 %v530
    %v565 = vpop.f32.mrb[0].mxu0
    %v566 = vadd.f32 %v184, %v565
    %v567 = vpop.f32.mrb[0].mxu0
    %v568 = vpop.f32.mrb[0].mxu0
    %v569 = vpop.f32.mrb[0].mxu0
    %570 = vdwg.mxu0
    %v571 = vtanh.pop %v566
    %v572 = vpack.c.bf16 %v571, %v571
    %573 = vmatprep.subr.bf16.mxu0 0
    %574 = vmatpush1.bf16.msra.mxu0 %v221
    %575 = vmatprep.subr.bf16.mxu0 0
    %576 = vmatpush1.bf16.msra.mxu0 %v222
    %577 = vmatprep.subr.bf16.mxu0 0
    %578 = vmatpush1.bf16.msra.mxu0 %v223
    %579 = vmatprep.subr.bf16.mxu0 0
    %580 = vmatpush1.bf16.msra.mxu0 %v224
    %581 = vmatprep.subr.bf16.mxu0 0
    %582 = vmatpush1.bf16.msra.mxu0 %v225
    %583 = vmatprep.subr.bf16.mxu0 0
    %584 = vmatpush1.bf16.msra.mxu0 %v226
    %585 = vmatprep.subr.bf16.mxu0 0
    %586 = vmatpush1.bf16.msra.mxu0 %v227
    %587 = vmatprep.subr.bf16.mxu0 0
    %588 = vmatpush1.bf16.msra.mxu0 %v228
    %589 = vmatprep.subr.bf16.mxu0 0
    %590 = vmatpush1.bf16.msra.mxu0 0
    %591 = vmatprep.subr.bf16.mxu0 0
    %592 = vmatpush1.bf16.msra.mxu0 0
    %593 = vmatprep.subr.bf16.mxu0 0
    %594 = vmatpush1.bf16.msra.mxu0 0
    %595 = vmatprep.subr.bf16.mxu0 0
    %596 = vmatpush1.bf16.msra.mxu0 0
    %597 = vmatprep.subr.bf16.mxu0 0
    %598 = vmatpush1.bf16.msra.mxu0 0
    %599 = vmatprep.subr.bf16.mxu0 0
    %600 = vmatpush1.bf16.msra.mxu0 0
    %601 = vmatprep.subr.bf16.mxu0 0
    %602 = vmatpush1.bf16.msra.mxu0 0
    %603 = vmatprep.subr.bf16.mxu0 0
    %604 = vmatpush1.bf16.msra.mxu0 0
    %605 = vmatprep.mubr.bf16.mxu0 0
    %606 = vmatmul.mubr.bf16.gmra.mrb[0].mxu0 %v572
    %v607 = vpop.f32.mrb[0].mxu0
    %v608 = vadd.f32 %v184, %v607
    %v609 = vpop.f32.mrb[0].mxu0
    %v610 = vpop.f32.mrb[0].mxu0
    %v611 = vpop.f32.mrb[0].mxu0
    %612 = vdwg.mxu0
    %v613 = vtanh.pop %v608
    %v614 = vpack.c.bf16 %v613, %v613
    %615 = vmatprep.subr.bf16.mxu0 0
    %616 = vmatpush1.bf16.msra.mxu0 %v221
    %617 = vmatprep.subr.bf16.mxu0 0
    %618 = vmatpush1.bf16.msra.mxu0 %v222
    %619 = vmatprep.subr.bf16.mxu0 0
    %620 = vmatpush1.bf16.msra.mxu0 %v223
    %621 = vmatprep.subr.bf16.mxu0 0
    %622 = vmatpush1.bf16.msra.mxu0 %v224
    %623 = vmatprep.subr.bf16.mxu0 0
    %624 = vmatpush1.bf16.msra.mxu0 %v225
    %625 = vmatprep.subr.bf16.mxu0 0
    %626 = vmatpush1.bf16.msra.mxu0 %v226
    %627 = vmatprep.subr.bf16.mxu0 0
    %628 = vmatpush1.bf16.msra.mxu0 %v227
    %629 = vmatprep.subr.bf16.mxu0 0
    %630 = vmatpush1.bf16.msra.mxu0 %v228
    %631 = vmatprep.subr.bf16.mxu0 0
    %632 = vmatpush1.bf16.msra.mxu0 0
    %633 = vmatprep.subr.bf16.mxu0 0
    %634 = vmatpush1.bf16.msra.mxu0 0
    %635 = vmatprep.subr.bf16.mxu0 0
    %636 = vmatpush1.bf16.msra.mxu0 0
    %637 = vmatprep.subr.bf16.mxu0 0
    %638 = vmatpush1.bf16.msra.mxu0 0
    %639 = vmatprep.subr.bf16.mxu0 0
    %640 = vmatpush1.bf16.msra.mxu0 0
    %641 = vmatprep.subr.bf16.mxu0 0
    %642 = vmatpush1.bf16.msra.mxu0 0
    %643 = vmatprep.subr.bf16.mxu0 0
    %644 = vmatpush1.bf16.msra.mxu0 0
    %645 = vmatprep.subr.bf16.mxu0 0
    %646 = vmatpush1.bf16.msra.mxu0 0
    %647 = vmatprep.mubr.bf16.mxu0 0
    %648 = vmatmul.mubr.bf16.gmra.mrb[0].mxu0 %v614
    %v649 = vpop.f32.mrb[0].mxu0
    %v650 = vadd.f32 %v184, %v649
    %v651 = vpop.f32.mrb[0].mxu0
    %v652 = vpop.f32.mrb[0].mxu0
    %v653 = vpop.f32.mrb[0].mxu0
    %654 = vdwg.mxu0
    %v655 = vtanh.pop %v650
    %v656 = vpack.c.bf16 %v655, %v655
    %657 = vmatprep.subr.bf16.mxu0 0
    %658 = vmatpush1.bf16.msra.mxu0 %v221
    %659 = vmatprep.subr.bf16.mxu0 0
    %660 = vmatpush1.bf16.msra.mxu0 %v222
    %661 = vmatprep.subr.bf16.mxu0 0
    %662 = vmatpush1.bf16.msra.mxu0 %v223
    %663 = vmatprep.subr.bf16.mxu0 0
    %664 = vmatpush1.bf16.msra.mxu0 %v224
    %665 = vmatprep.subr.bf16.mxu0 0
    %666 = vmatpush1.bf16.msra.mxu0 %v225
    %667 = vmatprep.subr.bf16.mxu0 0
    %668 = vmatpush1.bf16.msra.mxu0 %v226
    %669 = vmatprep.subr.bf16.mxu0 0
    %670 = vmatpush1.bf16.msra.mxu0 %v227
    %671 = vmatprep.subr.bf16.mxu0 0
    %672 = vmatpush1.bf16.msra.mxu0 %v228
    %673 = vmatprep.subr.bf16.mxu0 0
    %674 = vmatpush1.bf16.msra.mxu0 0
    %675 = vmatprep.subr.bf16.mxu0 0
    %676 = vmatpush1.bf16.msra.mxu0 0
    %677 = vmatprep.subr.bf16.mxu0 0
    %678 = vmatpush1.bf16.msra.mxu0 0
    %679 = vmatprep.subr.bf16.mxu0 0
    %680 = vmatpush1.bf16.msra.mxu0 0
    %681 = vmatprep.subr.bf16.mxu0 0
    %682 = vmatpush1.bf16.msra.mxu0 0
    %683 = vmatprep.subr.bf16.mxu0 0
    %684 = vmatpush1.bf16.msra.mxu0 0
    %685 = vmatprep.subr.bf16.mxu0 0
    %686 = vmatpush1.bf16.msra.mxu0 0
    %687 = vmatprep.subr.bf16.mxu0 0
    %688 = vmatpush1.bf16.msra.mxu0 0
    %689 = vmatprep.mubr.bf16.mxu0 0
    %690 = vmatmul.mubr.bf16.gmra.mrb[0].mxu0 %v656
    %v691 = vpop.f32.mrb[0].mxu0
    %v692 = vadd.f32 %v184, %v691
    %v693 = vpop.f32.mrb[0].mxu0
    %v694 = vpop.f32.mrb[0].mxu0
    %v695 = vpop.f32.mrb[0].mxu0
    %696 = vdwg.mxu0
    %v697 = vtanh.pop %v692
    %v698 = vpack.c.bf16 %v697, %v697
    %699 = vmatprep.subr.bf16.mxu0 0
    %700 = vmatpush1.bf16.msra.mxu0 %v221
    %701 = vmatprep.subr.bf16.mxu0 0
    %702 = vmatpush1.bf16.msra.mxu0 %v222
    %703 = vmatprep.subr.bf16.mxu0 0
    %704 = vmatpush1.bf16.msra.mxu0 %v223
    %705 = vmatprep.subr.bf16.mxu0 0
    %706 = vmatpush1.bf16.msra.mxu0 %v224
    %707 = vmatprep.subr.bf16.mxu0 0
    %708 = vmatpush1.bf16.msra.mxu0 %v225
    %709 = vmatprep.subr.bf16.mxu0 0
    %710 = vmatpush1.bf16.msra.mxu0 %v226
    %711 = vmatprep.subr.bf16.mxu0 0
    %712 = vmatpush1.bf16.msra.mxu0 %v227
    %713 = vmatprep.subr.bf16.mxu0 0
    %714 = vmatpush1.bf16.msra.mxu0 %v228
    %715 = vmatprep.subr.bf16.mxu0 0
    %716 = vmatpush1.bf16.msra.mxu0 0
    %717 = vmatprep.subr.bf16.mxu0 0
    %718 = vmatpush1.bf16.msra.mxu0 0
    %719 = vmatprep.subr.bf16.mxu0 0
    %720 = vmatpush1.bf16.msra.mxu0 0
    %721 = vmatprep.subr.bf16.mxu0 0
    %722 = vmatpush1.bf16.msra.mxu0 0
    %723 = vmatprep.subr.bf16.mxu0 0
    %724 = vmatpush1.bf16.msra.mxu0 0
    %725 = vmatprep.subr.bf16.mxu0 0
    %726 = vmatpush1.bf16.msra.mxu0 0
    %727 = vmatprep.subr.bf16.mxu0 0
    %728 = vmatpush1.bf16.msra.mxu0 0
    %729 = vmatprep.subr.bf16.mxu0 0
    %730 = vmatpush1.bf16.msra.mxu0 0
    %731 = vmatprep.mubr.bf16.mxu0 0
    %732 = vmatmul.mubr.bf16.gmra.mrb[0].mxu0 %v698
    %v733 = vpop.f32.mrb[0].mxu0
    %v734 = vadd.f32 %v184, %v733
    %v735 = vpop.f32.mrb[0].mxu0
    %v736 = vpop.f32.mrb[0].mxu0
    %v737 = vpop.f32.mrb[0].mxu0
    %738 = vdwg.mxu0
    %v739 = vtanh.pop %v734
    %v740 = vpack.c.bf16 %v739, %v739
    %741 = vmatprep.subr.bf16.mxu0 0
    %742 = vmatpush1.bf16.msra.mxu0 %v221
    %743 = vmatprep.subr.bf16.mxu0 0
    %744 = vmatpush1.bf16.msra.mxu0 %v222
    %745 = vmatprep.subr.bf16.mxu0 0
    %746 = vmatpush1.bf16.msra.mxu0 %v223
    %747 = vmatprep.subr.bf16.mxu0 0
    %748 = vmatpush1.bf16.msra.mxu0 %v224
    %749 = vmatprep.subr.bf16.mxu0 0
    %750 = vmatpush1.bf16.msra.mxu0 %v225
    %751 = vmatprep.subr.bf16.mxu0 0
    %752 = vmatpush1.bf16.msra.mxu0 %v226
    %753 = vmatprep.subr.bf16.mxu0 0
    %754 = vmatpush1.bf16.msra.mxu0 %v227
    %755 = vmatprep.subr.bf16.mxu0 0
    %756 = vmatpush1.bf16.msra.mxu0 %v228
    %757 = vmatprep.subr.bf16.mxu0 0
    %758 = vmatpush1.bf16.msra.mxu0 0
    %759 = vmatprep.subr.bf16.mxu0 0
    %760 = vmatpush1.bf16.msra.mxu0 0
    %761 = vmatprep.subr.bf16.mxu0 0
    %762 = vmatpush1.bf16.msra.mxu0 0
    %763 = vmatprep.subr.bf16.mxu0 0
    %764 = vmatpush1.bf16.msra.mxu0 0
    %765 = vmatprep.subr.bf16.mxu0 0
    %766 = vmatpush1.bf16.msra.mxu0 0
    %767 = vmatprep.subr.bf16.mxu0 0
    %768 = vmatpush1.bf16.msra.mxu0 0
    %769 = vmatprep.subr.bf16.mxu0 0
    %770 = vmatpush1.bf16.msra.mxu0 0
    %771 = vmatprep.subr.bf16.mxu0 0
    %772 = vmatpush1.bf16.msra.mxu0 0
    %773 = vmatprep.mubr.bf16.mxu0 0
    %774 = vmatmul.mubr.bf16.gmra.mrb[0].mxu0 %v740
    %v775 = vpop.f32.mrb[0].mxu0
    %v776 = vadd.f32 %v184, %v775
    %v777 = vpop.f32.mrb[0].mxu0
    %v778 = vpop.f32.mrb[0].mxu0
    %v779 = vpop.f32.mrb[0].mxu0
    %780 = vdwg.mxu0
    %v781 = vtanh.pop %v776
    %v782 = vpack.c.bf16 %v781, %v781
    %783 = vmatprep.subr.bf16.mxu0 0
    %784 = vmatpush1.bf16.msra.mxu0 %v221
    %785 = vmatprep.subr.bf16.mxu0 0
    %786 = vmatpush1.bf16.msra.mxu0 %v222
    %787 = vmatprep.subr.bf16.mxu0 0
    %788 = vmatpush1.bf16.msra.mxu0 %v223
    %789 = vmatprep.subr.bf16.mxu0 0
    %790 = vmatpush1.bf16.msra.mxu0 %v224
    %791 = vmatprep.subr.bf16.mxu0 0
    %792 = vmatpush1.bf16.msra.mxu0 %v225
    %793 = vmatprep.subr.bf16.mxu0 0
    %794 = vmatpush1.bf16.msra.mxu0 %v226
    %795 = vmatprep.subr.bf16.mxu0 0
    %796 = vmatpush1.bf16.msra.mxu0 %v227
    %797 = vmatprep.subr.bf16.mxu0 0
    %798 = vmatpush1.bf16.msra.mxu0 %v228
    %799 = vmatprep.subr.bf16.mxu0 0
    %800 = vmatpush1.bf16.msra.mxu0 0
    %801 = vmatprep.subr.bf16.mxu0 0
    %802 = vmatpush1.bf16.msra.mxu0 0
    %803 = vmatprep.subr.bf16.mxu0 0
    %804 = vmatpush1.bf16.msra.mxu0 0
    %805 = vmatprep.subr.bf16.mxu0 0
    %806 = vmatpush1.bf16.msra.mxu0 0
    %807 = vmatprep.subr.bf16.mxu0 0
    %808 = vmatpush1.bf16.msra.mxu0 0
    %809 = vmatprep.subr.bf16.mxu0 0
    %810 = vmatpush1.bf16.msra.mxu0 0
    %811 = vmatprep.subr.bf16.mxu0 0
    %812 = vmatpush1.bf16.msra.mxu0 0
    %813 = vmatprep.subr.bf16.mxu0 0
    %814 = vmatpush1.bf16.msra.mxu0 0
    %815 = vmatprep.mubr.bf16.mxu0 0
    %816 = vmatmul.mubr.bf16.gmra.mrb[0].mxu0 %v782
    %v817 = vpop.f32.mrb[0].mxu0
    %v818 = vadd.f32 %v184, %v817
    %v819 = vpop.f32.mrb[0].mxu0
    %v820 = vpop.f32.mrb[0].mxu0
    %v821 = vpop.f32.mrb[0].mxu0
    %822 = vdwg.mxu0
    %v823 = vtanh.pop %v818
    %v824 = vpack.c.bf16 %v823, %v823
    %825 = vmatprep.subr.bf16.mxu0 0
    %826 = vmatpush1.bf16.msra.mxu0 %v221
    %827 = vmatprep.subr.bf16.mxu0 0
    %828 = vmatpush1.bf16.msra.mxu0 %v222
    %829 = vmatprep.subr.bf16.mxu0 0
    %830 = vmatpush1.bf16.msra.mxu0 %v223
    %831 = vmatprep.subr.bf16.mxu0 0
    %832 = vmatpush1.bf16.msra.mxu0 %v224
    %833 = vmatprep.subr.bf16.mxu0 0
    %834 = vmatpush1.bf16.msra.mxu0 %v225
    %835 = vmatprep.subr.bf16.mxu0 0
    %836 = vmatpush1.bf16.msra.mxu0 %v226
    %837 = vmatprep.subr.bf16.mxu0 0
    %838 = vmatpush1.bf16.msra.mxu0 %v227
    %839 = vmatprep.subr.bf16.mxu0 0
    %840 = vmatpush1.bf16.msra.mxu0 %v228
    %841 = vmatprep.subr.bf16.mxu0 0
    %842 = vmatpush1.bf16.msra.mxu0 0
    %843 = vmatprep.subr.bf16.mxu0 0
    %844 = vmatpush1.bf16.msra.mxu0 0
    %845 = vmatprep.subr.bf16.mxu0 0
    %846 = vmatpush1.bf16.msra.mxu0 0
    %847 = vmatprep.subr.bf16.mxu0 0
    %848 = vmatpush1.bf16.msra.mxu0 0
    %849 = vmatprep.subr.bf16.mxu0 0
    %850 = vmatpush1.bf16.msra.mxu0 0
    %851 = vmatprep.subr.bf16.mxu0 0
    %852 = vmatpush1.bf16.msra.mxu0 0
    %853 = vmatprep.subr.bf16.mxu0 0
    %854 = vmatpush1.bf16.msra.mxu0 0
    %855 = vmatprep.subr.bf16.mxu0 0
    %856 = vmatpush1.bf16.msra.mxu0 0
    %857 = vmatprep.mubr.bf16.mxu0 0
    %858 = vmatmul.mubr.bf16.gmra.mrb[0].mxu0 %v824
    %v859 = vpop.f32.mrb[0].mxu0
    %v860 = vadd.f32 %v184, %v859
    %v861 = vpop.f32.mrb[0].mxu0
    %v862 = vpop.f32.mrb[0].mxu0
    %v863 = vpop.f32.mrb[0].mxu0
    %864 = vdwg.mxu0
    %v865 = vtanh.pop %v860
    %v866 = vpack.c.bf16 %v865, %v865
    %867 = vmatprep.subr.bf16.mxu0 0
    %868 = vmatpush1.bf16.msra.mxu0 %v221
    %869 = vmatprep.subr.bf16.mxu0 0
    %870 = vmatpush1.bf16.msra.mxu0 %v222
    %871 = vmatprep.subr.bf16.mxu0 0
    %872 = vmatpush1.bf16.msra.mxu0 %v223
    %873 = vmatprep.subr.bf16.mxu0 0
    %874 = vmatpush1.bf16.msra.mxu0 %v224
    %875 = vmatprep.subr.bf16.mxu0 0
    %876 = vmatpush1.bf16.msra.mxu0 %v225
    %877 = vmatprep.subr.bf16.mxu0 0
    %878 = vmatpush1.bf16.msra.mxu0 %v226
    %879 = vmatprep.subr.bf16.mxu0 0
    %880 = vmatpush1.bf16.msra.mxu0 %v227
    %881 = vmatprep.subr.bf16.mxu0 0
    %882 = vmatpush1.bf16.msra.mxu0 %v228
    %883 = vmatprep.subr.bf16.mxu0 0
    %884 = vmatpush1.bf16.msra.mxu0 0
    %885 = vmatprep.subr.bf16.mxu0 0
    %886 = vmatpush1.bf16.msra.mxu0 0
    %887 = vmatprep.subr.bf16.mxu0 0
    %888 = vmatpush1.bf16.msra.mxu0 0
    %889 = vmatprep.subr.bf16.mxu0 0
    %890 = vmatpush1.bf16.msra.mxu0 0
    %891 = vmatprep.subr.bf16.mxu0 0
    %892 = vmatpush1.bf16.msra.mxu0 0
    %893 = vmatprep.subr.bf16.mxu0 0
    %894 = vmatpush1.bf16.msra.mxu0 0
    %895 = vmatprep.subr.bf16.mxu0 0
    %896 = vmatpush1.bf16.msra.mxu0 0
    %897 = vmatprep.subr.bf16.mxu0 0
    %898 = vmatpush1.bf16.msra.mxu0 0
    %899 = vmatprep.mubr.bf16.mxu0 0
    %900 = vmatmul.mubr.bf16.gmra.mrb[0].mxu0 %v866
    %v901 = vpop.f32.mrb[0].mxu0
    %v902 = vadd.f32 %v184, %v901
    %v903 = vpop.f32.mrb[0].mxu0
    %v904 = vpop.f32.mrb[0].mxu0
    %v905 = vpop.f32.mrb[0].mxu0
    %906 = vdwg.mxu0
    %v907 = vtanh.pop %v902
    %v908 = vpack.c.bf16 %v907, %v907
    %909 = vmatprep.subr.bf16.mxu0 0
    %910 = vmatpush1.bf16.msra.mxu0 %v221
    %911 = vmatprep.subr.bf16.mxu0 0
    %912 = vmatpush1.bf16.msra.mxu0 %v222
    %913 = vmatprep.subr.bf16.mxu0 0
    %914 = vmatpush1.bf16.msra.mxu0 %v223
    %915 = vmatprep.subr.bf16.mxu0 0
    %916 = vmatpush1.bf16.msra.mxu0 %v224
    %917 = vmatprep.subr.bf16.mxu0 0
    %918 = vmatpush1.bf16.msra.mxu0 %v225
    %919 = vmatprep.subr.bf16.mxu0 0
    %920 = vmatpush1.bf16.msra.mxu0 %v226
    %921 = vmatprep.subr.bf16.mxu0 0
    %922 = vmatpush1.bf16.msra.mxu0 %v227
    %923 = vmatprep.subr.bf16.mxu0 0
    %924 = vmatpush1.bf16.msra.mxu0 %v228
    %925 = vmatprep.subr.bf16.mxu0 0
    %926 = vmatpush1.bf16.msra.mxu0 0
    %927 = vmatprep.subr.bf16.mxu0 0
    %928 = vmatpush1.bf16.msra.mxu0 0
    %929 = vmatprep.subr.bf16.mxu0 0
    %930 = vmatpush1.bf16.msra.mxu0 0
    %931 = vmatprep.subr.bf16.mxu0 0
    %932 = vmatpush1.bf16.msra.mxu0 0
    %933 = vmatprep.subr.bf16.mxu0 0
    %934 = vmatpush1.bf16.msra.mxu0 0
    %935 = vmatprep.subr.bf16.mxu0 0
    %936 = vmatpush1.bf16.msra.mxu0 0
    %937 = vmatprep.subr.bf16.mxu0 0
    %938 = vmatpush1.bf16.msra.mxu0 0
    %939 = vmatprep.subr.bf16.mxu0 0
    %940 = vmatpush1.bf16.msra.mxu0 0
    %941 = vmatprep.mubr.bf16.mxu0 0
    %942 = vmatmul.mubr.bf16.gmra.mrb[0].mxu0 %v908
    %v943 = vpop.f32.mrb[0].mxu0
    %v944 = vadd.f32 %v184, %v943
    %v945 = vpop.f32.mrb[0].mxu0
    %v946 = vpop.f32.mrb[0].mxu0
    %v947 = vpop.f32.mrb[0].mxu0
    %948 = vdwg.mxu0
    %v949 = vtanh.pop %v944
    %v950 = vpack.c.bf16 %v949, %v949
    %951 = vmatprep.subr.bf16.mxu0 0
    %952 = vmatpush1.bf16.msra.mxu0 %v221
    %953 = vmatprep.subr.bf16.mxu0 0
    %954 = vmatpush1.bf16.msra.mxu0 %v222
    %955 = vmatprep.subr.bf16.mxu0 0
    %956 = vmatpush1.bf16.msra.mxu0 %v223
    %957 = vmatprep.subr.bf16.mxu0 0
    %958 = vmatpush1.bf16.msra.mxu0 %v224
    %959 = vmatprep.subr.bf16.mxu0 0
    %960 = vmatpush1.bf16.msra.mxu0 %v225
    %961 = vmatprep.subr.bf16.mxu0 0
    %962 = vmatpush1.bf16.msra.mxu0 %v226
    %963 = vmatprep.subr.bf16.mxu0 0
    %964 = vmatpush1.bf16.msra.mxu0 %v227
    %965 = vmatprep.subr.bf16.mxu0 0
    %966 = vmatpush1.bf16.msra.mxu0 %v228
    %967 = vmatprep.subr.bf16.mxu0 0
    %968 = vmatpush1.bf16.msra.mxu0 0
    %969 = vmatprep.subr.bf16.mxu0 0
    %970 = vmatpush1.bf16.msra.mxu0 0
    %971 = vmatprep.subr.bf16.mxu0 0
    %972 = vmatpush1.bf16.msra.mxu0 0
    %973 = vmatprep.subr.bf16.mxu0 0
    %974 = vmatpush1.bf16.msra.mxu0 0
    %975 = vmatprep.subr.bf16.mxu0 0
    %976 = vmatpush1.bf16.msra.mxu0 0
    %977 = vmatprep.subr.bf16.mxu0 0
    %978 = vmatpush1.bf16.msra.mxu0 0
    %979 = vmatprep.subr.bf16.mxu0 0
    %980 = vmatpush1.bf16.msra.mxu0 0
    %981 = vmatprep.subr.bf16.mxu0 0
    %982 = vmatpush1.bf16.msra.mxu0 0
    %983 = vmatprep.mubr.bf16.mxu0 0
    %984 = vmatmul.mubr.bf16.gmra.mrb[0].mxu0 %v950
    %v985 = vpop.f32.mrb[0].mxu0
    %v986 = vadd.f32 %v184, %v985
    %v987 = vpop.f32.mrb[0].mxu0
    %v988 = vpop.f32.mrb[0].mxu0
    %v989 = vpop.f32.mrb[0].mxu0
    %990 = vdwg.mxu0
    %v991 = vtanh.pop %v986
    %v992 = vpack.c.bf16 %v991, %v991
    %993 = vmatprep.subr.bf16.mxu0 0
    %994 = vmatpush1.bf16.msra.mxu0 %v221
    %995 = vmatprep.subr.bf16.mxu0 0
    %996 = vmatpush1.bf16.msra.mxu0 %v222
    %997 = vmatprep.subr.bf16.mxu0 0
    %998 = vmatpush1.bf16.msra.mxu0 %v223
    %999 = vmatprep.subr.bf16.mxu0 0
    %1000 = vmatpush1.bf16.msra.mxu0 %v224
    %1001 = vmatprep.subr.bf16.mxu0 0
    %1002 = vmatpush1.bf16.msra.mxu0 %v225
    %1003 = vmatprep.subr.bf16.mxu0 0
    %1004 = vmatpush1.bf16.msra.mxu0 %v226
    %1005 = vmatprep.subr.bf16.mxu0 0
    %1006 = vmatpush1.bf16.msra.mxu0 %v227
    %1007 = vmatprep.subr.bf16.mxu0 0
    %1008 = vmatpush1.bf16.msra.mxu0 %v228
    %1009 = vmatprep.subr.bf16.mxu0 0
    %1010 = vmatpush1.bf16.msra.mxu0 0
    %1011 = vmatprep.subr.bf16.mxu0 0
    %1012 = vmatpush1.bf16.msra.mxu0 0
    %1013 = vmatprep.subr.bf16.mxu0 0
    %1014 = vmatpush1.bf16.msra.mxu0 0
    %1015 = vmatprep.subr.bf16.mxu0 0
    %1016 = vmatpush1.bf16.msra.mxu0 0
    %1017 = vmatprep.subr.bf16.mxu0 0
    %1018 = vmatpush1.bf16.msra.mxu0 0
    %1019 = vmatprep.subr.bf16.mxu0 0
    %1020 = vmatpush1.bf16.msra.mxu0 0
    %1021 = vmatprep.subr.bf16.mxu0 0
    %1022 = vmatpush1.bf16.msra.mxu0 0
    %1023 = vmatprep.subr.bf16.mxu0 0
    %1024 = vmatpush1.bf16.msra.mxu0 0
    %1025 = vmatprep.mubr.bf16.mxu0 0
    %1026 = vmatmul.mubr.bf16.gmra.mrb[0].mxu0 %v992
    %v1027 = vpop.f32.mrb[0].mxu0
    %v1028 = vadd.f32 %v184, %v1027
    %v1029 = vpop.f32.mrb[0].mxu0
    %v1030 = vpop.f32.mrb[0].mxu0
    %v1031 = vpop.f32.mrb[0].mxu0
    %1032 = vdwg.mxu0
    %v1033 = vtanh.pop %v1028
    %v1034 = vpack.c.bf16 %v1033, %v1033
    %1035 = vmatprep.subr.bf16.mxu0 0
    %1036 = vmatpush1.bf16.msra.mxu0 %v221
    %1037 = vmatprep.subr.bf16.mxu0 0
    %1038 = vmatpush1.bf16.msra.mxu0 %v222
    %1039 = vmatprep.subr.bf16.mxu0 0
    %1040 = vmatpush1.bf16.msra.mxu0 %v223
    %1041 = vmatprep.subr.bf16.mxu0 0
    %1042 = vmatpush1.bf16.msra.mxu0 %v224
    %1043 = vmatprep.subr.bf16.mxu0 0
    %1044 = vmatpush1.bf16.msra.mxu0 %v225
    %1045 = vmatprep.subr.bf16.mxu0 0
    %1046 = vmatpush1.bf16.msra.mxu0 %v226
    %1047 = vmatprep.subr.bf16.mxu0 0
    %1048 = vmatpush1.bf16.msra.mxu0 %v227
    %1049 = vmatprep.subr.bf16.mxu0 0
    %1050 = vmatpush1.bf16.msra.mxu0 %v228
    %1051 = vmatprep.subr.bf16.mxu0 0
    %1052 = vmatpush1.bf16.msra.mxu0 0
    %1053 = vmatprep.subr.bf16.mxu0 0
    %1054 = vmatpush1.bf16.msra.mxu0 0
    %1055 = vmatprep.subr.bf16.mxu0 0
    %1056 = vmatpush1.bf16.msra.mxu0 0
    %1057 = vmatprep.subr.bf16.mxu0 0
    %1058 = vmatpush1.bf16.msra.mxu0 0
    %1059 = vmatprep.subr.bf16.mxu0 0
    %1060 = vmatpush1.bf16.msra.mxu0 0
    %1061 = vmatprep.subr.bf16.mxu0 0
    %1062 = vmatpush1.bf16.msra.mxu0 0
    %1063 = vmatprep.subr.bf16.mxu0 0
    %1064 = vmatpush1.bf16.msra.mxu0 0
    %1065 = vmatprep.subr.bf16.mxu0 0
    %1066 = vmatpush1.bf16.msra.mxu0 0
    %1067 = vmatprep.mubr.bf16.mxu0 0
    %1068 = vmatmul.mubr.bf16.gmra.mrb[0].mxu0 %v1034
    %v1069 = vpop.f32.mrb[0].mxu0
    %v1070 = vadd.f32 %v184, %v1069
    %v1071 = vpop.f32.mrb[0].mxu0
    %v1072 = vpop.f32.mrb[0].mxu0
    %v1073 = vpop.f32.mrb[0].mxu0
    %1074 = vdwg.mxu0
    %v1075 = vtanh.pop %v1070
    %v1076 = vpack.c.bf16 %v1075, %v1075
    %1077 = vmatprep.subr.bf16.mxu0 0
    %1078 = vmatpush1.bf16.msra.mxu0 %v221
    %1079 = vmatprep.subr.bf16.mxu0 0
    %1080 = vmatpush1.bf16.msra.mxu0 %v222
    %1081 = vmatprep.subr.bf16.mxu0 0
    %1082 = vmatpush1.bf16.msra.mxu0 %v223
    %1083 = vmatprep.subr.bf16.mxu0 0
    %1084 = vmatpush1.bf16.msra.mxu0 %v224
    %1085 = vmatprep.subr.bf16.mxu0 0
    %1086 = vmatpush1.bf16.msra.mxu0 %v225
    %1087 = vmatprep.subr.bf16.mxu0 0
    %1088 = vmatpush1.bf16.msra.mxu0 %v226
    %1089 = vmatprep.subr.bf16.mxu0 0
    %1090 = vmatpush1.bf16.msra.mxu0 %v227
    %1091 = vmatprep.subr.bf16.mxu0 0
    %1092 = vmatpush1.bf16.msra.mxu0 %v228
    %1093 = vmatprep.subr.bf16.mxu0 0
    %1094 = vmatpush1.bf16.msra.mxu0 0
    %1095 = vmatprep.subr.bf16.mxu0 0
    %1096 = vmatpush1.bf16.msra.mxu0 0
    %1097 = vmatprep.subr.bf16.mxu0 0
    %1098 = vmatpush1.bf16.msra.mxu0 0
    %1099 = vmatprep.subr.bf16.mxu0 0
    %1100 = vmatpush1.bf16.msra.mxu0 0
    %1101 = vmatprep.subr.bf16.mxu0 0
    %1102 = vmatpush1.bf16.msra.mxu0 0
    %1103 = vmatprep.subr.bf16.mxu0 0
    %1104 = vmatpush1.bf16.msra.mxu0 0
    %1105 = vmatprep.subr.bf16.mxu0 0
    %1106 = vmatpush1.bf16.msra.mxu0 0
    %1107 = vmatprep.subr.bf16.mxu0 0
    %1108 = vmatpush1.bf16.msra.mxu0 0
    %1109 = vmatprep.mubr.bf16.mxu0 0
    %1110 = vmatmul.mubr.bf16.gmra.mrb[0].mxu0 %v1076
    %v1111 = vpop.f32.mrb[0].mxu0
    %v1112 = vadd.f32 %v184, %v1111
    %v1113 = vpop.f32.mrb[0].mxu0
    %v1114 = vpop.f32.mrb[0].mxu0
    %v1115 = vpop.f32.mrb[0].mxu0
    %1116 = vdwg.mxu0
    %v1117 = vtanh.pop %v1112
    %v1118 = vpack.c.bf16 %v1117, %v1117
    %1119 = vmatprep.subr.bf16.mxu0 0
    %1120 = vmatpush1.bf16.msra.mxu0 %v221
    %1121 = vmatprep.subr.bf16.mxu0 0
    %1122 = vmatpush1.bf16.msra.mxu0 %v222
    %1123 = vmatprep.subr.bf16.mxu0 0
    %1124 = vmatpush1.bf16.msra.mxu0 %v223
    %1125 = vmatprep.subr.bf16.mxu0 0
    %1126 = vmatpush1.bf16.msra.mxu0 %v224
    %1127 = vmatprep.subr.bf16.mxu0 0
    %1128 = vmatpush1.bf16.msra.mxu0 %v225
    %1129 = vmatprep.subr.bf16.mxu0 0
    %1130 = vmatpush1.bf16.msra.mxu0 %v226
    %1131 = vmatprep.subr.bf16.mxu0 0
    %1132 = vmatpush1.bf16.msra.mxu0 %v227
    %1133 = vmatprep.subr.bf16.mxu0 0
    %1134 = vmatpush1.bf16.msra.mxu0 %v228
    %1135 = vmatprep.subr.bf16.mxu0 0
    %1136 = vmatpush1.bf16.msra.mxu0 0
    %1137 = vmatprep.subr.bf16.mxu0 0
    %1138 = vmatpush1.bf16.msra.mxu0 0
    %1139 = vmatprep.subr.bf16.mxu0 0
    %1140 = vmatpush1.bf16.msra.mxu0 0
    %1141 = vmatprep.subr.bf16.mxu0 0
    %1142 = vmatpush1.bf16.msra.mxu0 0
    %1143 = vmatprep.subr.bf16.mxu0 0
    %1144 = vmatpush1.bf16.msra.mxu0 0
    %1145 = vmatprep.subr.bf16.mxu0 0
    %1146 = vmatpush1.bf16.msra.mxu0 0
    %1147 = vmatprep.subr.bf16.mxu0 0
    %1148 = vmatpush1.bf16.msra.mxu0 0
    %1149 = vmatprep.subr.bf16.mxu0 0
    %1150 = vmatpush1.bf16.msra.mxu0 0
    %1151 = vmatprep.mubr.bf16.mxu0 0
    %1152 = vmatmul.mubr.bf16.gmra.mrb[0].mxu0 %v1118
    %v1153 = vpop.f32.mrb[0].mxu0
    %v1154 = vadd.f32 %v184, %v1153
    %v1155 = vpop.f32.mrb[0].mxu0
    %v1156 = vpop.f32.mrb[0].mxu0
    %v1157 = vpop.f32.mrb[0].mxu0
    %1158 = vdwg.mxu0
    %v1159 = vtanh.pop %v1154
    %v1160 = vpack.c.bf16 %v1159, %v1159
    %1161 = vmatprep.subr.bf16.mxu0 0
    %1162 = vmatpush1.bf16.msra.mxu0 %v221
    %1163 = vmatprep.subr.bf16.mxu0 0
    %1164 = vmatpush1.bf16.msra.mxu0 %v222
    %1165 = vmatprep.subr.bf16.mxu0 0
    %1166 = vmatpush1.bf16.msra.mxu0 %v223
    %1167 = vmatprep.subr.bf16.mxu0 0
    %1168 = vmatpush1.bf16.msra.mxu0 %v224
    %1169 = vmatprep.subr.bf16.mxu0 0
    %1170 = vmatpush1.bf16.msra.mxu0 %v225
    %1171 = vmatprep.subr.bf16.mxu0 0
    %1172 = vmatpush1.bf16.msra.mxu0 %v226
    %1173 = vmatprep.subr.bf16.mxu0 0
    %1174 = vmatpush1.bf16.msra.mxu0 %v227
    %1175 = vmatprep.subr.bf16.mxu0 0
    %1176 = vmatpush1.bf16.msra.mxu0 %v228
    %1177 = vmatprep.subr.bf16.mxu0 0
    %1178 = vmatpush1.bf16.msra.mxu0 0
    %1179 = vmatprep.subr.bf16.mxu0 0
    %1180 = vmatpush1.bf16.msra.mxu0 0
    %1181 = vmatprep.subr.bf16.mxu0 0
    %1182 = vmatpush1.bf16.msra.mxu0 0
    %1183 = vmatprep.subr.bf16.mxu0 0
    %1184 = vmatpush1.bf16.msra.mxu0 0
    %1185 = vmatprep.subr.bf16.mxu0 0
    %1186 = vmatpush1.bf16.msra.mxu0 0
    %1187 = vmatprep.subr.bf16.mxu0 0
    %1188 = vmatpush1.bf16.msra.mxu0 0
    %1189 = vmatprep.subr.bf16.mxu0 0
    %1190 = vmatpush1.bf16.msra.mxu0 0
    %1191 = vmatprep.subr.bf16.mxu0 0
    %1192 = vmatpush1.bf16.msra.mxu0 0
    %1193 = vmatprep.mubr.bf16.mxu0 0
    %1194 = vmatmul.mubr.bf16.gmra.mrb[0].mxu0 %v1160
    %v1195 = vpop.f32.mrb[0].mxu0
    %v1196 = vadd.f32 %v184, %v1195
    %v1197 = vpop.f32.mrb[0].mxu0
    %v1198 = vpop.f32.mrb[0].mxu0
    %v1199 = vpop.f32.mrb[0].mxu0
    %1200 = vdwg.mxu0
    %v1201 = vtanh.pop %v1196
    %v1202 = vpack.c.bf16 %v1201, %v1201
    %1203 = vmatprep.subr.bf16.mxu0 0
    %1204 = vmatpush1.bf16.msra.mxu0 %v221
    %1205 = vmatprep.subr.bf16.mxu0 0
    %1206 = vmatpush1.bf16.msra.mxu0 %v222
    %1207 = vmatprep.subr.bf16.mxu0 0
    %1208 = vmatpush1.bf16.msra.mxu0 %v223
    %1209 = vmatprep.subr.bf16.mxu0 0
    %1210 = vmatpush1.bf16.msra.mxu0 %v224
    %1211 = vmatprep.subr.bf16.mxu0 0
    %1212 = vmatpush1.bf16.msra.mxu0 %v225
    %1213 = vmatprep.subr.bf16.mxu0 0
    %1214 = vmatpush1.bf16.msra.mxu0 %v226
    %1215 = vmatprep.subr.bf16.mxu0 0
    %1216 = vmatpush1.bf16.msra.mxu0 %v227
    %1217 = vmatprep.subr.bf16.mxu0 0
    %1218 = vmatpush1.bf16.msra.mxu0 %v228
    %1219 = vmatprep.subr.bf16.mxu0 0
    %1220 = vmatpush1.bf16.msra.mxu0 0
    %1221 = vmatprep.subr.bf16.mxu0 0
    %1222 = vmatpush1.bf16.msra.mxu0 0
    %1223 = vmatprep.subr.bf16.mxu0 0
    %1224 = vmatpush1.bf16.msra.mxu0 0
    %1225 = vmatprep.subr.bf16.mxu0 0
    %1226 = vmatpush1.bf16.msra.mxu0 0
    %1227 = vmatprep.subr.bf16.mxu0 0
    %1228 = vmatpush1.bf16.msra.mxu0 0
    %1229 = vmatprep.subr.bf16.mxu0 0
    %1230 = vmatpush1.bf16.msra.mxu0 0
    %1231 = vmatprep.subr.bf16.mxu0 0
    %1232 = vmatpush1.bf16.msra.mxu0 0
    %1233 = vmatprep.subr.bf16.mxu0 0
    %1234 = vmatpush1.bf16.msra.mxu0 0
    %1235 = vmatprep.mubr.bf16.mxu0 0
    %1236 = vmatmul.mubr.bf16.gmra.mrb[0].mxu0 %v1202
    %v1237 = vpop.f32.mrb[0].mxu0
    %v1238 = vadd.f32 %v184, %v1237
    %v1239 = vpop.f32.mrb[0].mxu0
    %v1240 = vpop.f32.mrb[0].mxu0
    %v1241 = vpop.f32.mrb[0].mxu0
    %1242 = vdwg.mxu0
    %v1243 = vtanh.pop %v1238
    %v1244 = vpack.c.bf16 %v1243, %v1243
    %1245 = vmatprep.subr.bf16.mxu0 0
    %1246 = vmatpush1.bf16.msra.mxu0 %v221
    %1247 = vmatprep.subr.bf16.mxu0 0
    %1248 = vmatpush1.bf16.msra.mxu0 %v222
    %1249 = vmatprep.subr.bf16.mxu0 0
    %1250 = vmatpush1.bf16.msra.mxu0 %v223
    %1251 = vmatprep.subr.bf16.mxu0 0
    %1252 = vmatpush1.bf16.msra.mxu0 %v224
    %1253 = vmatprep.subr.bf16.mxu0 0
    %1254 = vmatpush1.bf16.msra.mxu0 %v225
    %1255 = vmatprep.subr.bf16.mxu0 0
    %1256 = vmatpush1.bf16.msra.mxu0 %v226
    %1257 = vmatprep.subr.bf16.mxu0 0
    %1258 = vmatpush1.bf16.msra.mxu0 %v227
    %1259 = vmatprep.subr.bf16.mxu0 0
    %1260 = vmatpush1.bf16.msra.mxu0 %v228
    %1261 = vmatprep.subr.bf16.mxu0 0
    %1262 = vmatpush1.bf16.msra.mxu0 0
    %1263 = vmatprep.subr.bf16.mxu0 0
    %1264 = vmatpush1.bf16.msra.mxu0 0
    %1265 = vmatprep.subr.bf16.mxu0 0
    %1266 = vmatpush1.bf16.msra.mxu0 0
    %1267 = vmatprep.subr.bf16.mxu0 0
    %1268 = vmatpush1.bf16.msra.mxu0 0
    %1269 = vmatprep.subr.bf16.mxu0 0
    %1270 = vmatpush1.bf16.msra.mxu0 0
    %1271 = vmatprep.subr.bf16.mxu0 0
    %1272 = vmatpush1.bf16.msra.mxu0 0
    %1273 = vmatprep.subr.bf16.mxu0 0
    %1274 = vmatpush1.bf16.msra.mxu0 0
    %1275 = vmatprep.subr.bf16.mxu0 0
    %1276 = vmatpush1.bf16.msra.mxu0 0
    %1277 = vmatprep.mubr.bf16.mxu0 0
    %1278 = vmatmul.mubr.bf16.gmra.mrb[0].mxu0 %v1244
    %v1279 = vpop.f32.mrb[0].mxu0
    %v1280 = vadd.f32 %v184, %v1279
    %v1281 = vpop.f32.mrb[0].mxu0
    %v1282 = vpop.f32.mrb[0].mxu0
    %v1283 = vpop.f32.mrb[0].mxu0
    %1284 = vdwg.mxu0
    %v1285 = vtanh.pop %v1280
    %v1286 = vpack.c.bf16 %v1285, %v1285
    %1287 = vmatprep.subr.bf16.mxu0 0
    %1288 = vmatpush1.bf16.msra.mxu0 %v221
    %1289 = vmatprep.subr.bf16.mxu0 0
    %1290 = vmatpush1.bf16.msra.mxu0 %v222
    %1291 = vmatprep.subr.bf16.mxu0 0
    %1292 = vmatpush1.bf16.msra.mxu0 %v223
    %1293 = vmatprep.subr.bf16.mxu0 0
    %1294 = vmatpush1.bf16.msra.mxu0 %v224
    %1295 = vmatprep.subr.bf16.mxu0 0
    %1296 = vmatpush1.bf16.msra.mxu0 %v225
    %1297 = vmatprep.subr.bf16.mxu0 0
    %1298 = vmatpush1.bf16.msra.mxu0 %v226
    %1299 = vmatprep.subr.bf16.mxu0 0
    %1300 = vmatpush1.bf16.msra.mxu0 %v227
    %1301 = vmatprep.subr.bf16.mxu0 0
    %1302 = vmatpush1.bf16.msra.mxu0 %v228
    %1303 = vmatprep.subr.bf16.mxu0 0
    %1304 = vmatpush1.bf16.msra.mxu0 0
    %1305 = vmatprep.subr.bf16.mxu0 0
    %1306 = vmatpush1.bf16.msra.mxu0 0
    %1307 = vmatprep.subr.bf16.mxu0 0
    %1308 = vmatpush1.bf16.msra.mxu0 0
    %1309 = vmatprep.subr.bf16.mxu0 0
    %1310 = vmatpush1.bf16.msra.mxu0 0
    %1311 = vmatprep.subr.bf16.mxu0 0
    %1312 = vmatpush1.bf16.msra.mxu0 0
    %1313 = vmatprep.subr.bf16.mxu0 0
    %1314 = vmatpush1.bf16.msra.mxu0 0
    %1315 = vmatprep.subr.bf16.mxu0 0
    %1316 = vmatpush1.bf16.msra.mxu0 0
    %1317 = vmatprep.subr.bf16.mxu0 0
    %1318 = vmatpush1.bf16.msra.mxu0 0
    %1319 = vmatprep.mubr.bf16.mxu0 0
    %1320 = vmatmul.mubr.bf16.gmra.mrb[0].mxu0 %v1286
    %v1321 = vpop.f32.mrb[0].mxu0
    %v1322 = vadd.f32 %v184, %v1321
    %v1323 = vpop.f32.mrb[0].mxu0
    %v1324 = vpop.f32.mrb[0].mxu0
    %v1325 = vpop.f32.mrb[0].mxu0
    %1326 = vdwg.mxu0
    %v1327 = vtanh.pop %v1322
    %v1328 = vpack.c.bf16 %v1327, %v1327
    %1329 = vmatprep.subr.bf16.mxu0 0
    %1330 = vmatpush1.bf16.msra.mxu0 %v221
    %1331 = vmatprep.subr.bf16.mxu0 0
    %1332 = vmatpush1.bf16.msra.mxu0 %v222
    %1333 = vmatprep.subr.bf16.mxu0 0
    %1334 = vmatpush1.bf16.msra.mxu0 %v223
    %1335 = vmatprep.subr.bf16.mxu0 0
    %1336 = vmatpush1.bf16.msra.mxu0 %v224
    %1337 = vmatprep.subr.bf16.mxu0 0
    %1338 = vmatpush1.bf16.msra.mxu0 %v225
    %1339 = vmatprep.subr.bf16.mxu0 0
    %1340 = vmatpush1.bf16.msra.mxu0 %v226
    %1341 = vmatprep.subr.bf16.mxu0 0
    %1342 = vmatpush1.bf16.msra.mxu0 %v227
    %1343 = vmatprep.subr.bf16.mxu0 0
    %1344 = vmatpush1.bf16.msra.mxu0 %v228
    %1345 = vmatprep.subr.bf16.mxu0 0
    %1346 = vmatpush1.bf16.msra.mxu0 0
    %1347 = vmatprep.subr.bf16.mxu0 0
    %1348 = vmatpush1.bf16.msra.mxu0 0
    %1349 = vmatprep.subr.bf16.mxu0 0
    %1350 = vmatpush1.bf16.msra.mxu0 0
    %1351 = vmatprep.subr.bf16.mxu0 0
    %1352 = vmatpush1.bf16.msra.mxu0 0
    %1353 = vmatprep.subr.bf16.mxu0 0
    %1354 = vmatpush1.bf16.msra.mxu0 0
    %1355 = vmatprep.subr.bf16.mxu0 0
    %1356 = vmatpush1.bf16.msra.mxu0 0
    %1357 = vmatprep.subr.bf16.mxu0 0
    %1358 = vmatpush1.bf16.msra.mxu0 0
    %1359 = vmatprep.subr.bf16.mxu0 0
    %1360 = vmatpush1.bf16.msra.mxu0 0
    %1361 = vmatprep.mubr.bf16.mxu0 0
    %1362 = vmatmul.mubr.bf16.gmra.mrb[0].mxu0 %v1328
    %v1363 = vpop.f32.mrb[0].mxu0
    %v1364 = vadd.f32 %v184, %v1363
    %v1365 = vpop.f32.mrb[0].mxu0
    %v1366 = vpop.f32.mrb[0].mxu0
    %v1367 = vpop.f32.mrb[0].mxu0
    %1368 = vdwg.mxu0
    %v1369 = vtanh.pop %v1364
    %v1370 = vpack.c.bf16 %v1369, %v1369
    %1371 = vmatprep.subr.bf16.mxu0 0
    %1372 = vmatpush1.bf16.msra.mxu0 %v221
    %1373 = vmatprep.subr.bf16.mxu0 0
    %1374 = vmatpush1.bf16.msra.mxu0 %v222
    %1375 = vmatprep.subr.bf16.mxu0 0
    %1376 = vmatpush1.bf16.msra.mxu0 %v223
    %1377 = vmatprep.subr.bf16.mxu0 0
    %1378 = vmatpush1.bf16.msra.mxu0 %v224
    %1379 = vmatprep.subr.bf16.mxu0 0
    %1380 = vmatpush1.bf16.msra.mxu0 %v225
    %1381 = vmatprep.subr.bf16.mxu0 0
    %1382 = vmatpush1.bf16.msra.mxu0 %v226
    %1383 = vmatprep.subr.bf16.mxu0 0
    %1384 = vmatpush1.bf16.msra.mxu0 %v227
    %1385 = vmatprep.subr.bf16.mxu0 0
    %1386 = vmatpush1.bf16.msra.mxu0 %v228
    %1387 = vmatprep.subr.bf16.mxu0 0
    %1388 = vmatpush1.bf16.msra.mxu0 0
    %1389 = vmatprep.subr.bf16.mxu0 0
    %1390 = vmatpush1.bf16.msra.mxu0 0
    %1391 = vmatprep.subr.bf16.mxu0 0
    %1392 = vmatpush1.bf16.msra.mxu0 0
    %1393 = vmatprep.subr.bf16.mxu0 0
    %1394 = vmatpush1.bf16.msra.mxu0 0
    %1395 = vmatprep.subr.bf16.mxu0 0
    %1396 = vmatpush1.bf16.msra.mxu0 0
    %1397 = vmatprep.subr.bf16.mxu0 0
    %1398 = vmatpush1.bf16.msra.mxu0 0
    %1399 = vmatprep.subr.bf16.mxu0 0
    %1400 = vmatpush1.bf16.msra.mxu0 0
    %1401 = vmatprep.subr.bf16.mxu0 0
    %1402 = vmatpush1.bf16.msra.mxu0 0
    %1403 = vmatprep.mubr.bf16.mxu0 0
    %1404 = vmatmul.mubr.bf16.gmra.mrb[0].mxu0 %v1370
    %v1405 = vpop.f32.mrb[0].mxu0
    %v1406 = vadd.f32 %v184, %v1405
    %v1407 = vpop.f32.mrb[0].mxu0
    %v1408 = vpop.f32.mrb[0].mxu0
    %v1409 = vpop.f32.mrb[0].mxu0
    %1410 = vdwg.mxu0
    %v1411 = vtanh.pop %v1406
    %v1412 = vpack.c.bf16 %v1411, %v1411
    %1413 = vmatprep.subr.bf16.mxu0 0
    %1414 = vmatpush1.bf16.msra.mxu0 %v221
    %1415 = vmatprep.subr.bf16.mxu0 0
    %1416 = vmatpush1.bf16.msra.mxu0 %v222
    %1417 = vmatprep.subr.bf16.mxu0 0
    %1418 = vmatpush1.bf16.msra.mxu0 %v223
    %1419 = vmatprep.subr.bf16.mxu0 0
    %1420 = vmatpush1.bf16.msra.mxu0 %v224
    %1421 = vmatprep.subr.bf16.mxu0 0
    %1422 = vmatpush1.bf16.msra.mxu0 %v225
    %1423 = vmatprep.subr.bf16.mxu0 0
    %1424 = vmatpush1.bf16.msra.mxu0 %v226
    %1425 = vmatprep.subr.bf16.mxu0 0
    %1426 = vmatpush1.bf16.msra.mxu0 %v227
    %1427 = vmatprep.subr.bf16.mxu0 0
    %1428 = vmatpush1.bf16.msra.mxu0 %v228
    %1429 = vmatprep.subr.bf16.mxu0 0
    %1430 = vmatpush1.bf16.msra.mxu0 0
    %1431 = vmatprep.subr.bf16.mxu0 0
    %1432 = vmatpush1.bf16.msra.mxu0 0
    %1433 = vmatprep.subr.bf16.mxu0 0
    %1434 = vmatpush1.bf16.msra.mxu0 0
    %1435 = vmatprep.subr.bf16.mxu0 0
    %1436 = vmatpush1.bf16.msra.mxu0 0
    %1437 = vmatprep.subr.bf16.mxu0 0
    %1438 = vmatpush1.bf16.msra.mxu0 0
    %1439 = vmatprep.subr.bf16.mxu0 0
    %1440 = vmatpush1.bf16.msra.mxu0 0
    %1441 = vmatprep.subr.bf16.mxu0 0
    %1442 = vmatpush1.bf16.msra.mxu0 0
    %1443 = vmatprep.subr.bf16.mxu0 0
    %1444 = vmatpush1.bf16.msra.mxu0 0
    %1445 = vmatprep.mubr.bf16.mxu0 0
    %1446 = vmatmul.mubr.bf16.gmra.mrb[0].mxu0 %v1412
    %v1447 = vpop.f32.mrb[0].mxu0
    %v1448 = vadd.f32 %v184, %v1447
    %v1449 = vpop.f32.mrb[0].mxu0
    %v1450 = vpop.f32.mrb[0].mxu0
    %v1451 = vpop.f32.mrb[0].mxu0
    %1452 = vdwg.mxu0
    %v1453 = vtanh.pop %v1448
    %v1454 = vpack.c.bf16 %v1453, %v1453
    %1455 = vmatprep.subr.bf16.mxu0 0
    %1456 = vmatpush1.bf16.msra.mxu0 %v221
    %1457 = vmatprep.subr.bf16.mxu0 0
    %1458 = vmatpush1.bf16.msra.mxu0 %v222
    %1459 = vmatprep.subr.bf16.mxu0 0
    %1460 = vmatpush1.bf16.msra.mxu0 %v223
    %1461 = vmatprep.subr.bf16.mxu0 0
    %1462 = vmatpush1.bf16.msra.mxu0 %v224
    %1463 = vmatprep.subr.bf16.mxu0 0
    %1464 = vmatpush1.bf16.msra.mxu0 %v225
    %1465 = vmatprep.subr.bf16.mxu0 0
    %1466 = vmatpush1.bf16.msra.mxu0 %v226
    %1467 = vmatprep.subr.bf16.mxu0 0
    %1468 = vmatpush1.bf16.msra.mxu0 %v227
    %1469 = vmatprep.subr.bf16.mxu0 0
    %1470 = vmatpush1.bf16.msra.mxu0 %v228
    %1471 = vmatprep.subr.bf16.mxu0 0
    %1472 = vmatpush1.bf16.msra.mxu0 0
    %1473 = vmatprep.subr.bf16.mxu0 0
    %1474 = vmatpush1.bf16.msra.mxu0 0
    %1475 = vmatprep.subr.bf16.mxu0 0
    %1476 = vmatpush1.bf16.msra.mxu0 0
    %1477 = vmatprep.subr.bf16.mxu0 0
    %1478 = vmatpush1.bf16.msra.mxu0 0
    %1479 = vmatprep.subr.bf16.mxu0 0
    %1480 = vmatpush1.bf16.msra.mxu0 0
    %1481 = vmatprep.subr.bf16.mxu0 0
    %1482 = vmatpush1.bf16.msra.mxu0 0
    %1483 = vmatprep.subr.bf16.mxu0 0
    %1484 = vmatpush1.bf16.msra.mxu0 0
    %1485 = vmatprep.subr.bf16.mxu0 0
    %1486 = vmatpush1.bf16.msra.mxu0 0
    %1487 = vmatprep.mubr.bf16.mxu0 0
    %1488 = vmatmul.mubr.bf16.gmra.mrb[0].mxu0 %v1454
    %v1489 = vpop.f32.mrb[0].mxu0
    %v1490 = vadd.f32 %v184, %v1489
    %v1491 = vpop.f32.mrb[0].mxu0
    %v1492 = vpop.f32.mrb[0].mxu0
    %v1493 = vpop.f32.mrb[0].mxu0
    %1494 = vdwg.mxu0
    %v1495 = vtanh.pop %v1490
    %v1496 = vpack.c.bf16 %v1495, %v1495
    %1497 = vmatprep.subr.bf16.mxu0 0
    %1498 = vmatpush1.bf16.msra.mxu0 %v221
    %1499 = vmatprep.subr.bf16.mxu0 0
    %1500 = vmatpush1.bf16.msra.mxu0 %v222
    %1501 = vmatprep.subr.bf16.mxu0 0
    %1502 = vmatpush1.bf16.msra.mxu0 %v223
    %1503 = vmatprep.subr.bf16.mxu0 0
    %1504 = vmatpush1.bf16.msra.mxu0 %v224
    %1505 = vmatprep.subr.bf16.mxu0 0
    %1506 = vmatpush1.bf16.msra.mxu0 %v225
    %1507 = vmatprep.subr.bf16.mxu0 0
    %1508 = vmatpush1.bf16.msra.mxu0 %v226
    %1509 = vmatprep.subr.bf16.mxu0 0
    %1510 = vmatpush1.bf16.msra.mxu0 %v227
    %1511 = vmatprep.subr.bf16.mxu0 0
    %1512 = vmatpush1.bf16.msra.mxu0 %v228
    %1513 = vmatprep.subr.bf16.mxu0 0
    %1514 = vmatpush1.bf16.msra.mxu0 0
    %1515 = vmatprep.subr.bf16.mxu0 0
    %1516 = vmatpush1.bf16.msra.mxu0 0
    %1517 = vmatprep.subr.bf16.mxu0 0
    %1518 = vmatpush1.bf16.msra.mxu0 0
    %1519 = vmatprep.subr.bf16.mxu0 0
    %1520 = vmatpush1.bf16.msra.mxu0 0
    %1521 = vmatprep.subr.bf16.mxu0 0
    %1522 = vmatpush1.bf16.msra.mxu0 0
    %1523 = vmatprep.subr.bf16.mxu0 0
    %1524 = vmatpush1.bf16.msra.mxu0 0
    %1525 = vmatprep.subr.bf16.mxu0 0
    %1526 = vmatpush1.bf16.msra.mxu0 0
    %1527 = vmatprep.subr.bf16.mxu0 0
    %1528 = vmatpush1.bf16.msra.mxu0 0
    %1529 = vmatprep.mubr.bf16.mxu0 0
    %1530 = vmatmul.mubr.bf16.gmra.mrb[0].mxu0 %v1496
    %v1531 = vpop.f32.mrb[0].mxu0
    %v1532 = vadd.f32 %v184, %v1531
    %v1533 = vpop.f32.mrb[0].mxu0
    %v1534 = vpop.f32.mrb[0].mxu0
    %v1535 = vpop.f32.mrb[0].mxu0
    %1536 = vdwg.mxu0
    %v1537 = vtanh.pop %v1532
    %v1538 = vpack.c.bf16 %v1537, %v1537
    %1539 = vmatprep.subr.bf16.mxu0 0
    %1540 = vmatpush1.bf16.msra.mxu0 %v221
    %1541 = vmatprep.subr.bf16.mxu0 0
    %1542 = vmatpush1.bf16.msra.mxu0 %v222
    %1543 = vmatprep.subr.bf16.mxu0 0
    %1544 = vmatpush1.bf16.msra.mxu0 %v223
    %1545 = vmatprep.subr.bf16.mxu0 0
    %1546 = vmatpush1.bf16.msra.mxu0 %v224
    %1547 = vmatprep.subr.bf16.mxu0 0
    %1548 = vmatpush1.bf16.msra.mxu0 %v225
    %1549 = vmatprep.subr.bf16.mxu0 0
    %1550 = vmatpush1.bf16.msra.mxu0 %v226
    %1551 = vmatprep.subr.bf16.mxu0 0
    %1552 = vmatpush1.bf16.msra.mxu0 %v227
    %1553 = vmatprep.subr.bf16.mxu0 0
    %1554 = vmatpush1.bf16.msra.mxu0 %v228
    %1555 = vmatprep.subr.bf16.mxu0 0
    %1556 = vmatpush1.bf16.msra.mxu0 0
    %1557 = vmatprep.subr.bf16.mxu0 0
    %1558 = vmatpush1.bf16.msra.mxu0 0
    %1559 = vmatprep.subr.bf16.mxu0 0
    %1560 = vmatpush1.bf16.msra.mxu0 0
    %1561 = vmatprep.subr.bf16.mxu0 0
    %1562 = vmatpush1.bf16.msra.mxu0 0
    %1563 = vmatprep.subr.bf16.mxu0 0
    %1564 = vmatpush1.bf16.msra.mxu0 0
    %1565 = vmatprep.subr.bf16.mxu0 0
    %1566 = vmatpush1.bf16.msra.mxu0 0
    %1567 = vmatprep.subr.bf16.mxu0 0
    %1568 = vmatpush1.bf16.msra.mxu0 0
    %1569 = vmatprep.subr.bf16.mxu0 0
    %1570 = vmatpush1.bf16.msra.mxu0 0
    %1571 = vmatprep.mubr.bf16.mxu0 0
    %1572 = vmatmul.mubr.bf16.gmra.mrb[0].mxu0 %v1538
    %v1573 = vpop.f32.mrb[0].mxu0
    %v1574 = vadd.f32 %v184, %v1573
    %v1575 = vpop.f32.mrb[0].mxu0
    %v1576 = vpop.f32.mrb[0].mxu0
    %v1577 = vpop.f32.mrb[0].mxu0
    %1578 = vdwg.mxu0
    %v1579 = vtanh.pop %v1574
    %v1580 = vpack.c.bf16 %v1579, %v1579
    %1581 = vmatprep.subr.bf16.mxu0 0
    %1582 = vmatpush1.bf16.msra.mxu0 %v221
    %1583 = vmatprep.subr.bf16.mxu0 0
    %1584 = vmatpush1.bf16.msra.mxu0 %v222
    %1585 = vmatprep.subr.bf16.mxu0 0
    %1586 = vmatpush1.bf16.msra.mxu0 %v223
    %1587 = vmatprep.subr.bf16.mxu0 0
    %1588 = vmatpush1.bf16.msra.mxu0 %v224
    %1589 = vmatprep.subr.bf16.mxu0 0
    %1590 = vmatpush1.bf16.msra.mxu0 %v225
    %1591 = vmatprep.subr.bf16.mxu0 0
    %1592 = vmatpush1.bf16.msra.mxu0 %v226
    %1593 = vmatprep.subr.bf16.mxu0 0
    %1594 = vmatpush1.bf16.msra.mxu0 %v227
    %1595 = vmatprep.subr.bf16.mxu0 0
    %1596 = vmatpush1.bf16.msra.mxu0 %v228
    %1597 = vmatprep.subr.bf16.mxu0 0
    %1598 = vmatpush1.bf16.msra.mxu0 0
    %1599 = vmatprep.subr.bf16.mxu0 0
    %1600 = vmatpush1.bf16.msra.mxu0 0
    %1601 = vmatprep.subr.bf16.mxu0 0
    %1602 = vmatpush1.bf16.msra.mxu0 0
    %1603 = vmatprep.subr.bf16.mxu0 0
    %1604 = vmatpush1.bf16.msra.mxu0 0
    %1605 = vmatprep.subr.bf16.mxu0 0
    %1606 = vmatpush1.bf16.msra.mxu0 0
    %1607 = vmatprep.subr.bf16.mxu0 0
    %1608 = vmatpush1.bf16.msra.mxu0 0
    %1609 = vmatprep.subr.bf16.mxu0 0
    %1610 = vmatpush1.bf16.msra.mxu0 0
    %1611 = vmatprep.subr.bf16.mxu0 0
    %1612 = vmatpush1.bf16.msra.mxu0 0
    %1613 = vmatprep.mubr.bf16.mxu0 0
    %1614 = vmatmul.mubr.bf16.gmra.mrb[0].mxu0 %v1580
    %v1615 = vpop.f32.mrb[0].mxu0
    %v1616 = vadd.f32 %v184, %v1615
    %v1617 = vpop.f32.mrb[0].mxu0
    %v1618 = vpop.f32.mrb[0].mxu0
    %v1619 = vpop.f32.mrb[0].mxu0
    %1620 = vdwg.mxu0
    %v1621 = vtanh.pop %v1616
    %v1622 = vpack.c.bf16 %v1621, %v1621
    %1623 = vmatprep.subr.bf16.mxu0 0
    %1624 = vmatpush1.bf16.msra.mxu0 %v221
    %1625 = vmatprep.subr.bf16.mxu0 0
    %1626 = vmatpush1.bf16.msra.mxu0 %v222
    %1627 = vmatprep.subr.bf16.mxu0 0
    %1628 = vmatpush1.bf16.msra.mxu0 %v223
    %1629 = vmatprep.subr.bf16.mxu0 0
    %1630 = vmatpush1.bf16.msra.mxu0 %v224
    %1631 = vmatprep.subr.bf16.mxu0 0
    %1632 = vmatpush1.bf16.msra.mxu0 %v225
    %1633 = vmatprep.subr.bf16.mxu0 0
    %1634 = vmatpush1.bf16.msra.mxu0 %v226
    %1635 = vmatprep.subr.bf16.mxu0 0
    %1636 = vmatpush1.bf16.msra.mxu0 %v227
    %1637 = vmatprep.subr.bf16.mxu0 0
    %1638 = vmatpush1.bf16.msra.mxu0 %v228
    %1639 = vmatprep.subr.bf16.mxu0 0
    %1640 = vmatpush1.bf16.msra.mxu0 0
    %1641 = vmatprep.subr.bf16.mxu0 0
    %1642 = vmatpush1.bf16.msra.mxu0 0
    %1643 = vmatprep.subr.bf16.mxu0 0
    %1644 = vmatpush1.bf16.msra.mxu0 0
    %1645 = vmatprep.subr.bf16.mxu0 0
    %1646 = vmatpush1.bf16.msra.mxu0 0
    %1647 = vmatprep.subr.bf16.mxu0 0
    %1648 = vmatpush1.bf16.msra.mxu0 0
    %1649 = vmatprep.subr.bf16.mxu0 0
    %1650 = vmatpush1.bf16.msra.mxu0 0
    %1651 = vmatprep.subr.bf16.mxu0 0
    %1652 = vmatpush1.bf16.msra.mxu0 0
    %1653 = vmatprep.subr.bf16.mxu0 0
    %1654 = vmatpush1.bf16.msra.mxu0 0
    %1655 = vmatprep.mubr.bf16.mxu0 0
    %1656 = vmatmul.mubr.bf16.gmra.mrb[0].mxu0 %v1622
    %v1657 = vpop.f32.mrb[0].mxu0
    %v1658 = vadd.f32 %v184, %v1657
    %v1659 = vpop.f32.mrb[0].mxu0
    %v1660 = vpop.f32.mrb[0].mxu0
    %v1661 = vpop.f32.mrb[0].mxu0
    %1662 = vdwg.mxu0
    %v1663 = vtanh.pop %v1658
    %v1664 = vpack.c.bf16 %v1663, %v1663
    %1665 = vmatprep.subr.bf16.mxu0 0
    %1666 = vmatpush1.bf16.msra.mxu0 %v221
    %1667 = vmatprep.subr.bf16.mxu0 0
    %1668 = vmatpush1.bf16.msra.mxu0 %v222
    %1669 = vmatprep.subr.bf16.mxu0 0
    %1670 = vmatpush1.bf16.msra.mxu0 %v223
    %1671 = vmatprep.subr.bf16.mxu0 0
    %1672 = vmatpush1.bf16.msra.mxu0 %v224
    %1673 = vmatprep.subr.bf16.mxu0 0
    %1674 = vmatpush1.bf16.msra.mxu0 %v225
    %1675 = vmatprep.subr.bf16.mxu0 0
    %1676 = vmatpush1.bf16.msra.mxu0 %v226
    %1677 = vmatprep.subr.bf16.mxu0 0
    %1678 = vmatpush1.bf16.msra.mxu0 %v227
    %1679 = vmatprep.subr.bf16.mxu0 0
    %1680 = vmatpush1.bf16.msra.mxu0 %v228
    %1681 = vmatprep.subr.bf16.mxu0 0
    %1682 = vmatpush1.bf16.msra.mxu0 0
    %1683 = vmatprep.subr.bf16.mxu0 0
    %1684 = vmatpush1.bf16.msra.mxu0 0
    %1685 = vmatprep.subr.bf16.mxu0 0
    %1686 = vmatpush1.bf16.msra.mxu0 0
    %1687 = vmatprep.subr.bf16.mxu0 0
    %1688 = vmatpush1.bf16.msra.mxu0 0
    %1689 = vmatprep.subr.bf16.mxu0 0
    %1690 = vmatpush1.bf16.msra.mxu0 0
    %1691 = vmatprep.subr.bf16.mxu0 0
    %1692 = vmatpush1.bf16.msra.mxu0 0
    %1693 = vmatprep.subr.bf16.mxu0 0
    %1694 = vmatpush1.bf16.msra.mxu0 0
    %1695 = vmatprep.subr.bf16.mxu0 0
    %1696 = vmatpush1.bf16.msra.mxu0 0
    %1697 = vmatprep.mubr.bf16.mxu0 0
    %1698 = vmatmul.mubr.bf16.gmra.mrb[0].mxu0 %v1664
    %v1699 = vpop.f32.mrb[0].mxu0
    %v1700 = vadd.f32 %v184, %v1699
    %v1701 = vpop.f32.mrb[0].mxu0
    %v1702 = vpop.f32.mrb[0].mxu0
    %v1703 = vpop.f32.mrb[0].mxu0
    %1704 = vdwg.mxu0
    %v1705 = vtanh.pop %v1700
    %v1706 = vpack.c.bf16 %v1705, %v1705
    %1707 = vmatprep.subr.bf16.mxu0 0
    %1708 = vmatpush1.bf16.msra.mxu0 %v221
    %1709 = vmatprep.subr.bf16.mxu0 0
    %1710 = vmatpush1.bf16.msra.mxu0 %v222
    %1711 = vmatprep.subr.bf16.mxu0 0
    %1712 = vmatpush1.bf16.msra.mxu0 %v223
    %1713 = vmatprep.subr.bf16.mxu0 0
    %1714 = vmatpush1.bf16.msra.mxu0 %v224
    %1715 = vmatprep.subr.bf16.mxu0 0
    %1716 = vmatpush1.bf16.msra.mxu0 %v225
    %1717 = vmatprep.subr.bf16.mxu0 0
    %1718 = vmatpush1.bf16.msra.mxu0 %v226
    %1719 = vmatprep.subr.bf16.mxu0 0
    %1720 = vmatpush1.bf16.msra.mxu0 %v227
    %1721 = vmatprep.subr.bf16.mxu0 0
    %1722 = vmatpush1.bf16.msra.mxu0 %v228
    %1723 = vmatprep.subr.bf16.mxu0 0
    %1724 = vmatpush1.bf16.msra.mxu0 0
    %1725 = vmatprep.subr.bf16.mxu0 0
    %1726 = vmatpush1.bf16.msra.mxu0 0
    %1727 = vmatprep.subr.bf16.mxu0 0
    %1728 = vmatpush1.bf16.msra.mxu0 0
    %1729 = vmatprep.subr.bf16.mxu0 0
    %1730 = vmatpush1.bf16.msra.mxu0 0
    %1731 = vmatprep.subr.bf16.mxu0 0
    %1732 = vmatpush1.bf16.msra.mxu0 0
    %1733 = vmatprep.subr.bf16.mxu0 0
    %1734 = vmatpush1.bf16.msra.mxu0 0
    %1735 = vmatprep.subr.bf16.mxu0 0
    %1736 = vmatpush1.bf16.msra.mxu0 0
    %1737 = vmatprep.subr.bf16.mxu0 0
    %1738 = vmatpush1.bf16.msra.mxu0 0
    %1739 = vmatprep.mubr.bf16.mxu0 0
    %1740 = vmatmul.mubr.bf16.gmra.mrb[0].mxu0 %v1706
    %v1741 = vpop.f32.mrb[0].mxu0
    %v1742 = vadd.f32 %v184, %v1741
    %v1743 = vpop.f32.mrb[0].mxu0
    %v1744 = vpop.f32.mrb[0].mxu0
    %v1745 = vpop.f32.mrb[0].mxu0
    %1746 = vdwg.mxu0
    %v1747 = vtanh.pop %v1742
    %v1748 = vpack.c.bf16 %v1747, %v1747
    %1749 = vmatprep.subr.bf16.mxu0 0
    %1750 = vmatpush1.bf16.msra.mxu0 %v221
    %1751 = vmatprep.subr.bf16.mxu0 0
    %1752 = vmatpush1.bf16.msra.mxu0 %v222
    %1753 = vmatprep.subr.bf16.mxu0 0
    %1754 = vmatpush1.bf16.msra.mxu0 %v223
    %1755 = vmatprep.subr.bf16.mxu0 0
    %1756 = vmatpush1.bf16.msra.mxu0 %v224
    %1757 = vmatprep.subr.bf16.mxu0 0
    %1758 = vmatpush1.bf16.msra.mxu0 %v225
    %1759 = vmatprep.subr.bf16.mxu0 0
    %1760 = vmatpush1.bf16.msra.mxu0 %v226
    %1761 = vmatprep.subr.bf16.mxu0 0
    %1762 = vmatpush1.bf16.msra.mxu0 %v227
    %1763 = vmatprep.subr.bf16.mxu0 0
    %1764 = vmatpush1.bf16.msra.mxu0 %v228
    %1765 = vmatprep.subr.bf16.mxu0 0
    %1766 = vmatpush1.bf16.msra.mxu0 0
    %1767 = vmatprep.subr.bf16.mxu0 0
    %1768 = vmatpush1.bf16.msra.mxu0 0
    %1769 = vmatprep.subr.bf16.mxu0 0
    %1770 = vmatpush1.bf16.msra.mxu0 0
    %1771 = vmatprep.subr.bf16.mxu0 0
    %1772 = vmatpush1.bf16.msra.mxu0 0
    %1773 = vmatprep.subr.bf16.mxu0 0
    %1774 = vmatpush1.bf16.msra.mxu0 0
    %1775 = vmatprep.subr.bf16.mxu0 0
    %1776 = vmatpush1.bf16.msra.mxu0 0
    %1777 = vmatprep.subr.bf16.mxu0 0
    %1778 = vmatpush1.bf16.msra.mxu0 0
    %1779 = vmatprep.subr.bf16.mxu0 0
    %1780 = vmatpush1.bf16.msra.mxu0 0
    %1781 = vmatprep.mubr.bf16.mxu0 0
    %1782 = vmatmul.mubr.bf16.gmra.mrb[0].mxu0 %v1748
    %v1783 = vpop.f32.mrb[0].mxu0
    %v1784 = vadd.f32 %v184, %v1783
    %v1785 = vpop.f32.mrb[0].mxu0
    %v1786 = vpop.f32.mrb[0].mxu0
    %v1787 = vpop.f32.mrb[0].mxu0
    %1788 = vdwg.mxu0
    %v1789 = vtanh.pop %v1784
    %v1790 = vpack.c.bf16 %v1789, %v1789
    %1791 = vmatprep.subr.bf16.mxu0 0
    %1792 = vmatpush1.bf16.msra.mxu0 %v221
    %1793 = vmatprep.subr.bf16.mxu0 0
    %1794 = vmatpush1.bf16.msra.mxu0 %v222
    %1795 = vmatprep.subr.bf16.mxu0 0
    %1796 = vmatpush1.bf16.msra.mxu0 %v223
    %1797 = vmatprep.subr.bf16.mxu0 0
    %1798 = vmatpush1.bf16.msra.mxu0 %v224
    %1799 = vmatprep.subr.bf16.mxu0 0
    %1800 = vmatpush1.bf16.msra.mxu0 %v225
    %1801 = vmatprep.subr.bf16.mxu0 0
    %1802 = vmatpush1.bf16.msra.mxu0 %v226
    %1803 = vmatprep.subr.bf16.mxu0 0
    %1804 = vmatpush1.bf16.msra.mxu0 %v227
    %1805 = vmatprep.subr.bf16.mxu0 0
    %1806 = vmatpush1.bf16.msra.mxu0 %v228
    %1807 = vmatprep.subr.bf16.mxu0 0
    %1808 = vmatpush1.bf16.msra.mxu0 0
    %1809 = vmatprep.subr.bf16.mxu0 0
    %1810 = vmatpush1.bf16.msra.mxu0 0
    %1811 = vmatprep.subr.bf16.mxu0 0
    %1812 = vmatpush1.bf16.msra.mxu0 0
    %1813 = vmatprep.subr.bf16.mxu0 0
    %1814 = vmatpush1.bf16.msra.mxu0 0
    %1815 = vmatprep.subr.bf16.mxu0 0
    %1816 = vmatpush1.bf16.msra.mxu0 0
    %1817 = vmatprep.subr.bf16.mxu0 0
    %1818 = vmatpush1.bf16.msra.mxu0 0
    %1819 = vmatprep.subr.bf16.mxu0 0
    %1820 = vmatpush1.bf16.msra.mxu0 0
    %1821 = vmatprep.subr.bf16.mxu0 0
    %1822 = vmatpush1.bf16.msra.mxu0 0
    %1823 = vmatprep.mubr.bf16.mxu0 0
    %1824 = vmatmul.mubr.bf16.gmra.mrb[0].mxu0 %v1790
    %v1825 = vpop.f32.mrb[0].mxu0
    %v1826 = vadd.f32 %v184, %v1825
    %v1827 = vpop.f32.mrb[0].mxu0
    %v1828 = vpop.f32.mrb[0].mxu0
    %v1829 = vpop.f32.mrb[0].mxu0
    %1830 = vdwg.mxu0
    %v1831 = vtanh.pop %v1826
    %v1832 = vpack.c.bf16 %v1831, %v1831
    %1833 = vmatprep.subr.bf16.mxu0 0
    %1834 = vmatpush1.bf16.msra.mxu0 %v221
    %1835 = vmatprep.subr.bf16.mxu0 0
    %1836 = vmatpush1.bf16.msra.mxu0 %v222
    %1837 = vmatprep.subr.bf16.mxu0 0
    %1838 = vmatpush1.bf16.msra.mxu0 %v223
    %1839 = vmatprep.subr.bf16.mxu0 0
    %1840 = vmatpush1.bf16.msra.mxu0 %v224
    %1841 = vmatprep.subr.bf16.mxu0 0
    %1842 = vmatpush1.bf16.msra.mxu0 %v225
    %1843 = vmatprep.subr.bf16.mxu0 0
    %1844 = vmatpush1.bf16.msra.mxu0 %v226
    %1845 = vmatprep.subr.bf16.mxu0 0
    %1846 = vmatpush1.bf16.msra.mxu0 %v227
    %1847 = vmatprep.subr.bf16.mxu0 0
    %1848 = vmatpush1.bf16.msra.mxu0 %v228
    %1849 = vmatprep.subr.bf16.mxu0 0
    %1850 = vmatpush1.bf16.msra.mxu0 0
    %1851 = vmatprep.subr.bf16.mxu0 0
    %1852 = vmatpush1.bf16.msra.mxu0 0
    %1853 = vmatprep.subr.bf16.mxu0 0
    %1854 = vmatpush1.bf16.msra.mxu0 0
    %1855 = vmatprep.subr.bf16.mxu0 0
    %1856 = vmatpush1.bf16.msra.mxu0 0
    %1857 = vmatprep.subr.bf16.mxu0 0
    %1858 = vmatpush1.bf16.msra.mxu0 0
    %1859 = vmatprep.subr.bf16.mxu0 0
    %1860 = vmatpush1.bf16.msra.mxu0 0
    %1861 = vmatprep.subr.bf16.mxu0 0
    %1862 = vmatpush1.bf16.msra.mxu0 0
    %1863 = vmatprep.subr.bf16.mxu0 0
    %1864 = vmatpush1.bf16.msra.mxu0 0
    %1865 = vmatprep.mubr.bf16.mxu0 0
    %1866 = vmatmul.mubr.bf16.gmra.mrb[0].mxu0 %v1832
    %v1867 = vpop.f32.mrb[0].mxu0
    %v1868 = vadd.f32 %v184, %v1867
    %v1869 = vpop.f32.mrb[0].mxu0
    %v1870 = vpop.f32.mrb[0].mxu0
    %v1871 = vpop.f32.mrb[0].mxu0
    %1872 = vdwg.mxu0
    %v1873 = vtanh.pop %v1868
    %v1874 = vpack.c.bf16 %v1873, %v1873
    %1875 = vmatprep.subr.bf16.mxu0 0
    %1876 = vmatpush1.bf16.msra.mxu0 %v221
    %1877 = vmatprep.subr.bf16.mxu0 0
    %1878 = vmatpush1.bf16.msra.mxu0 %v222
    %1879 = vmatprep.subr.bf16.mxu0 0
    %1880 = vmatpush1.bf16.msra.mxu0 %v223
    %1881 = vmatprep.subr.bf16.mxu0 0
    %1882 = vmatpush1.bf16.msra.mxu0 %v224
    %1883 = vmatprep.subr.bf16.mxu0 0
    %1884 = vmatpush1.bf16.msra.mxu0 %v225
    %1885 = vmatprep.subr.bf16.mxu0 0
    %1886 = vmatpush1.bf16.msra.mxu0 %v226
    %1887 = vmatprep.subr.bf16.mxu0 0
    %1888 = vmatpush1.bf16.msra.mxu0 %v227
    %1889 = vmatprep.subr.bf16.mxu0 0
    %1890 = vmatpush1.bf16.msra.mxu0 %v228
    %1891 = vmatprep.subr.bf16.mxu0 0
    %1892 = vmatpush1.bf16.msra.mxu0 0
    %1893 = vmatprep.subr.bf16.mxu0 0
    %1894 = vmatpush1.bf16.msra.mxu0 0
    %1895 = vmatprep.subr.bf16.mxu0 0
    %1896 = vmatpush1.bf16.msra.mxu0 0
    %1897 = vmatprep.subr.bf16.mxu0 0
    %1898 = vmatpush1.bf16.msra.mxu0 0
    %1899 = vmatprep.subr.bf16.mxu0 0
    %1900 = vmatpush1.bf16.msra.mxu0 0
    %1901 = vmatprep.subr.bf16.mxu0 0
    %1902 = vmatpush1.bf16.msra.mxu0 0
    %1903 = vmatprep.subr.bf16.mxu0 0
    %1904 = vmatpush1.bf16.msra.mxu0 0
    %1905 = vmatprep.subr.bf16.mxu0 0
    %1906 = vmatpush1.bf16.msra.mxu0 0
    %1907 = vmatprep.mubr.bf16.mxu0 0
    %1908 = vmatmul.mubr.bf16.gmra.mrb[0].mxu0 %v1874
    %v1909 = vpop.f32.mrb[0].mxu0
    %v1910 = vadd.f32 %v184, %v1909
    %v1911 = vpop.f32.mrb[0].mxu0
    %v1912 = vpop.f32.mrb[0].mxu0
    %v1913 = vpop.f32.mrb[0].mxu0
    %1914 = vdwg.mxu0
    %v1915 = vtanh.pop %v1910
    %v1916 = vpack.c.bf16 %v1915, %v1915
    %1917 = vmatprep.subr.bf16.mxu0 0
    %1918 = vmatpush1.bf16.msra.mxu0 %v221
    %1919 = vmatprep.subr.bf16.mxu0 0
    %1920 = vmatpush1.bf16.msra.mxu0 %v222
    %1921 = vmatprep.subr.bf16.mxu0 0
    %1922 = vmatpush1.bf16.msra.mxu0 %v223
    %1923 = vmatprep.subr.bf16.mxu0 0
    %1924 = vmatpush1.bf16.msra.mxu0 %v224
    %1925 = vmatprep.subr.bf16.mxu0 0
    %1926 = vmatpush1.bf16.msra.mxu0 %v225
    %1927 = vmatprep.subr.bf16.mxu0 0
    %1928 = vmatpush1.bf16.msra.mxu0 %v226
    %1929 = vmatprep.subr.bf16.mxu0 0
    %1930 = vmatpush1.bf16.msra.mxu0 %v227
    %1931 = vmatprep.subr.bf16.mxu0 0
    %1932 = vmatpush1.bf16.msra.mxu0 %v228
    %1933 = vmatprep.subr.bf16.mxu0 0
    %1934 = vmatpush1.bf16.msra.mxu0 0
    %1935 = vmatprep.subr.bf16.mxu0 0
    %1936 = vmatpush1.bf16.msra.mxu0 0
    %1937 = vmatprep.subr.bf16.mxu0 0
    %1938 = vmatpush1.bf16.msra.mxu0 0
    %1939 = vmatprep.subr.bf16.mxu0 0
    %1940 = vmatpush1.bf16.msra.mxu0 0
    %1941 = vmatprep.subr.bf16.mxu0 0
    %1942 = vmatpush1.bf16.msra.mxu0 0
    %1943 = vmatprep.subr.bf16.mxu0 0
    %1944 = vmatpush1.bf16.msra.mxu0 0
    %1945 = vmatprep.subr.bf16.mxu0 0
    %1946 = vmatpush1.bf16.msra.mxu0 0
    %1947 = vmatprep.subr.bf16.mxu0 0
    %1948 = vmatpush1.bf16.msra.mxu0 0
    %1949 = vmatprep.mubr.bf16.mxu0 0
    %1950 = vmatmul.mubr.bf16.gmra.mrb[0].mxu0 %v1916
    %v1951 = vpop.f32.mrb[0].mxu0
    %v1952 = vadd.f32 %v184, %v1951
    %v1953 = vpop.f32.mrb[0].mxu0
    %v1954 = vpop.f32.mrb[0].mxu0
    %v1955 = vpop.f32.mrb[0].mxu0
    %1956 = vdwg.mxu0
    %v1957 = vtanh.pop %v1952
    %v1958 = vsub.f32 %v1957, %v1915
    %v1959 = vmul.f32 %v1958, %v1958
    %1960 = vadd.xlane.f32.xlu0 %v1959
    %v1961 = vpop.xlane.xlu0 %1960
    %v1962 = vrot.slane %v1961, 4
    %v1963 = vadd.f32 %v1961, %v1962
    %v1964 = vrot.slane %v1963, 2
    %v1965 = vadd.f32 %v1963, %v1964
    %v1966 = vrot.slane %v1965, 1
    %v1967 = vadd.f32 %v1965, %v1966
    %s1968 = vtos %v1967
    %s1969 = smul.u32 0, 128
    %s1970 = scalar_lea.smem [#allocation10], %s1969
    %1971 = sst [smem:[%s1970]] %s1968
    %1972 = vst [vmem:[#allocation9] sm:$0xff] %v1915
    // Predicated region
    $region30: #{tpu_custom_call.1} parent=1 // pred_check
      _
    $region31: #{tpu_custom_call.1} parent=1 // pred_check_branch
      %1974 = sbr.rel (0) target = $region33
    $region32: #{tpu_custom_call.1} parent=1 // pred_region
      %s1976 = ssub.s32 128, 128
      %1977 = vsyncadd [#allocation4], %s1976
      %s1979 = sshll.u32 [#allocation9], 4
      %s1980 = int_to_ptr.vmem [resolvable:$true] %s1979
      %1982 = dma.vmem_to_hbm [thread:$0]  %s1980, 128, %s4, [#allocation4]
    $region33: #{tpu_custom_call.1} parent=1 // pred_fallthru
      _
    // Predicated region
    $region34: #{tpu_custom_call.1} parent=1 // pred_check
      _
    $region35: #{tpu_custom_call.1} parent=1 // pred_check_branch
      %1984 = sbr.rel (0) target = $region37
    $region36: #{tpu_custom_call.1} parent=1 // pred_region
      %s1986 = ssub.s32 16, 16
      %1987 = vsyncadd [#allocation5], %s1986
      %1990 = dma.smem_to_hbm [#allocation10], 16, %s5, [#allocation5]
    $region37: #{tpu_custom_call.1} parent=1 // pred_fallthru
      _
    // Predicated region
    $region38: #{tpu_custom_call.1} parent=1 // pred_check
      _
    $region39: #{tpu_custom_call.1} parent=1 // pred_check_branch
      %1992 = sbr.rel (0) target = $region41
    $region40: #{tpu_custom_call.1} parent=1 // pred_region
      %1993 = dma.done [#allocation4], 128
    $region41: #{tpu_custom_call.1} parent=1 // pred_fallthru
      _
    // Predicated region
    $region42: #{tpu_custom_call.1} parent=1 // pred_check
      _
    $region43: #{tpu_custom_call.1} parent=1 // pred_check_branch
      %1995 = sbr.rel (0) target = $region45
    $region44: #{tpu_custom_call.1} parent=1 // pred_region
      %1996 = dma.done [#allocation5], 16
    $region45: #{tpu_custom_call.1} parent=1 // pred_fallthru
      _
    %1997 = sfence
    %1998 = vsyncpa [#allocation3], 1
    %1999 = vsyncpa [#allocation7], 1
    %2000 = vsyncpa [#allocation4], 1
    %2001 = vsyncpa [#allocation5], 1

</llo_original>
